<compile_context>
chip_gen: v5e
topology: v5e:2x2
jax: 0.10.0
libtpu: 0.0.40
codegen_flags: <defaults>
</compile_context>

<pallas_src>
import math

import jax
import jax.numpy as jnp
from jax.experimental import pallas as pl
from jax.experimental.pallas import tpu as pltpu

BN_EPS = 1e-5
LRELU_SLOPE = 0.01
HIDDEN_DIMS = (256, 128, 64)
LANE = 128

# Row indices into the packed small-param table (biases / gammas / betas).
(R_B1, R_G1, R_BE1,
 R_B2, R_G2, R_BE2,
 R_B3, R_G3, R_BE3,
 R_BHEAD, R_BD0,
 R_BD1, R_GD1, R_BED1,
 R_BD2, R_GD2, R_BED2,
 R_BF) = range(18)
N_TAB_ROWS = 18


def _round_up(n, m):
    return (n + m - 1) // m * m


# --------------------------------- kernel ----------------------------------

def _make_betavae_kernel(lp):
    """Build the kernel.  `lp` = lane-padded latent dim (multiple of 128)."""

    def kernel(x_ref, eps_ref,
               w1_ref, w2_ref, w3_ref, whead_ref, wd0_ref, wd1_ref, wd2_ref,
               wf_ref, tab_ref,
               recons_ref, mu_ref, logvar_ref):

        def prow(r, width):
            # (1, width) static row slice of the packed bias/gamma/beta table.
            # (A stride-0 sublane-broadcast load would also pre-replicate the
            #  row; kept as a plain static slice for lowering safety.)
            return tab_ref[r:r + 1, :width]

        def linear(h, w_ref, b_row):
            # bf16 x bf16 matmul on the MXU with f32 accumulation + f32 bias.
            w = w_ref[...]
            return (jnp.dot(h, w, preferred_element_type=jnp.float32)
                    + prow(b_row, w.shape[1]))

        def lin_bn_lrelu(h, w_ref, b_row, g_row, be_row):
            width = w_ref.shape[1]
            y = linear(h, w_ref, b_row)                      # f32
            # Training-mode BatchNorm1d, exact two-pass biased variance
            # (matches torch batch stats), shortened serial chain:
            #   ym = y - mean;  out = ym * (gamma*rsqrt(var+eps)) + beta
            mean = jnp.mean(y, axis=0, keepdims=True)
            ym = y - mean
            var = jnp.mean(ym * ym, axis=0, keepdims=True)
            s = prow(g_row, width) * jax.lax.rsqrt(var + BN_EPS)
            y = ym * s + prow(be_row, width)
            # LeakyReLU(0.01): slope < 1  =>  max(x, slope*x)
            y = jnp.maximum(y, LRELU_SLOPE * y)
            return y.astype(jnp.bfloat16)                    # next MXU operand

        x = x_ref[...].astype(jnp.bfloat16)

        # ---------------- encoder ----------------
        h = lin_bn_lrelu(x, w1_ref, R_B1, R_G1, R_BE1)
        h = lin_bn_lrelu(h, w2_ref, R_B2, R_G2, R_BE2)
        h = lin_bn_lrelu(h, w3_ref, R_B3, R_G3, R_BE3)

        # Fused fc_mu / fc_var head: one matmul -> (B, 2*lp), split at a
        # 128-lane boundary.  Padded lanes are exactly zero.
        head = linear(h, whead_ref, R_BHEAD)
        mu = head[:, :lp]
        logvar = head[:, lp:]

        # ------------- reparameterize -------------
        # eps pad lanes (>= latent_dim) are ignored: wd0 pad rows are zero.
        z = eps_ref[...] * jnp.exp(0.5 * logvar) + mu

        # ---------------- decoder -----------------
        d = linear(z.astype(jnp.bfloat16), wd0_ref, R_BD0)   # decoder_input
        d = lin_bn_lrelu(d.astype(jnp.bfloat16), wd1_ref, R_BD1, R_GD1, R_BED1)
        d = lin_bn_lrelu(d, wd2_ref, R_BD2, R_GD2, R_BED2)
        recons = linear(d, wf_ref, R_BF)                     # (B, ip) f32

        # Three lane-dense (128-multiple) outputs: unmasked stores, no concat,
        # no slab temporary.
        recons_ref[...] = recons
        mu_ref[...] = mu
        logvar_ref[...] = logvar

    return kernel


# ------------------------------ param init ---------------------------------

def _linear_init(key, fan_in, fan_out):
    """PyTorch-style default init: U(-1/sqrt(fan_in), 1/sqrt(fan_in))."""
    kw, kb = jax.random.split(key)
    bound = 1.0 / math.sqrt(fan_in)
    w = jax.random.uniform(kw, (fan_in, fan_out), jnp.float32, -bound, bound)
    b = jax.random.uniform(kb, (1, fan_out), jnp.float32, -bound, bound)
    return w, b


def _bn_init(num_features):
    gamma = jnp.ones((1, num_features), jnp.float32)
    beta = jnp.zeros((1, num_features), jnp.float32)
    return gamma, beta


def init_betavae_params(key, in_dim, latent_dim):
    hidden_dims = list(HIDDEN_DIMS)
    keys = jax.random.split(key, 9)
    ki = iter(range(9))
    params = []

    # encoder
    d = in_dim
    for h in hidden_dims:
        w, b = _linear_init(keys[next(ki)], d, h)
        g, be = _bn_init(h)
        params += [w, b, g, be]
        d = h

    # fc_mu / fc_var
    wmu, bmu = _linear_init(keys[next(ki)], hidden_dims[-1], latent_dim)
    wvar, bvar = _linear_init(keys[next(ki)], hidden_dims[-1], latent_dim)
    params += [wmu, bmu, wvar, bvar]

    # decoder_input
    wd0, bd0 = _linear_init(keys[next(ki)], latent_dim, hidden_dims[-1])
    params += [wd0, bd0]

    # decoder (hidden_dims reversed: 64 -> 128 -> 256)
    rev = list(reversed(hidden_dims))
    d = rev[0]
    for h in rev[1:]:
        w, b = _linear_init(keys[next(ki)], d, h)
        g, be = _bn_init(h)
        params += [w, b, g, be]
        d = h

    # final layer (256 -> in_dim)
    wf, bf = _linear_init(keys[next(ki)], rev[-1], in_dim)
    params += [wf, bf]
    return params


# ----------------------------- operand packing ------------------------------

def pack_betavae_operands(params, in_dim, latent_dim):
    """ONE-TIME packing (call at init, not per forward).

    Pads every layer to a 128-lane multiple, fuses fc_mu/fc_var into one
    weight, casts matmul weights to bf16, and packs all 18 small per-feature
    params into a single f32 table (one operand / one DMA).
    """
    (w1, b1, g1, be1,
     w2, b2, g2, be2,
     w3, b3, g3, be3,
     wmu, bmu, wvar, bvar,
     wd0, bd0,
     wd1, bd1, gd1, bed1,
     wd2, bd2, gd2, bed2,
     wf, bf) = params

    hp = _round_up(HIDDEN_DIMS[-1], LANE)   # 64  -> 128
    lp = _round_up(latent_dim, LANE)        # lane-padded latent
    ip = _round_up(in_dim, LANE)            # lane-padded recons width

    def pad_cols(a, n):
        return jnp.pad(a, ((0, 0), (0, n - a.shape[1])))

    def pad_rows(a, n):
        return jnp.pad(a, ((0, n - a.shape[0]), (0, 0)))

    def bf16(a):
        return a.astype(jnp.bfloat16)

    # Encoder weights (x kept unpadded: (B, in_dim) @ (in_dim, 256)).
    w1p = bf16(w1)                                           # (in_dim, 256)
    w2p = bf16(w2)                                           # (256, 128)
    w3p = bf16(pad_cols(w3, hp))                             # (128, hp)

    # Fused latent head: (hp, 2*lp) weight, (1, 2*lp) bias; zero pads.
    whead = bf16(pad_rows(
        jnp.concatenate([pad_cols(wmu, lp), pad_cols(wvar, lp)], axis=1), hp))
    bhead = jnp.concatenate([pad_cols(bmu, lp), pad_cols(bvar, lp)], axis=1)

    # Decoder weights.
    wd0p = bf16(pad_cols(pad_rows(wd0, lp), hp))             # (lp, hp)
    wd1p = bf16(pad_rows(wd1, hp))                           # (hp, 128)
    wd2p = bf16(wd2)                                         # (128, 256)
    wfp = bf16(pad_cols(wf, ip))                             # (256, ip)

    rows = [b1, g1, be1,
            b2, g2, be2,
            pad_cols(b3, hp), pad_cols(g3, hp), pad_cols(be3, hp),
            bhead, pad_cols(bd0, hp),
            bd1, gd1, bed1,
            bd2, gd2, bed2,
            pad_cols(bf, ip)]
    assert len(rows) == N_TAB_ROWS
    tab_w = _round_up(max(r.shape[1] for r in rows), LANE)
    tab = jnp.concatenate([pad_cols(r, tab_w) for r in rows], axis=0)
    pad_r = (-tab.shape[0]) % 8
    if pad_r:
        tab = jnp.pad(tab, ((0, pad_r), (0, 0)))

    weights = (w1p, w2p, w3p, whead, wd0p, wd1p, wd2p, wfp)
    return {"weights": weights, "tab": tab,
            "in_dim": in_dim, "latent_dim": latent_dim,
            "ip": ip, "lp": lp, "hp": hp}


# -------------------------------- wrapper -----------------------------------

def betavae_forward(x, eps, packed):
    """Returns [recons, input, mu, log_var] just like betaVAE.forward.

    `packed` comes from pack_betavae_operands (done once at init).
    `eps` is preferably pre-padded to (B, lp); pad lanes are ignored by the
    kernel. An (B, latent_dim) eps is also accepted (padded here).
    """
    B, in_dim = x.shape
    assert in_dim == packed["in_dim"]
    latent_dim = packed["latent_dim"]
    ip, lp = packed["ip"], packed["lp"]

    if eps.shape[1] < lp:
        eps = jnp.pad(eps, ((0, 0), (0, lp - eps.shape[1])))

    vmem = pl.BlockSpec(memory_space=pltpu.MemorySpace.VMEM)
    inputs = (x, eps) + packed["weights"] + (packed["tab"],)

    # Single-step kernel: whole batch + all (tiny, bf16) weights resident in
    # VMEM, no grid / pipelining machinery.  Training-mode BN statistics need
    # the full batch in one invocation, so the batch is intentionally NOT
    # tiled here.
    # TODO(synk): for many independent batches / large B, add a leading
    # "parallel" grid axis over batch groups (per-group BN stats) to use
    # v7x's second TensorCore and pipeline the DMAs.
    recons_p, mu_p, logvar_p = pl.pallas_call(
        _make_betavae_kernel(lp),
        out_shape=(jax.ShapeDtypeStruct((B, ip), jnp.float32),
                   jax.ShapeDtypeStruct((B, lp), jnp.float32),
                   jax.ShapeDtypeStruct((B, lp), jnp.float32)),
        in_specs=[vmem] * len(inputs),
        out_specs=(vmem, vmem, vmem),
        compiler_params=pltpu.CompilerParams(
            # Tiny today (<2 MiB); explicit limit keeps the whole-batch design
            # compiling on v5e's 16 MiB scoped default / v7x's 64 MiB VMEM if
            # B is scaled up.
            vmem_limit_bytes=32 * 1024 * 1024),
    )(*inputs)

    recons = recons_p[:, :in_dim]
    mu = mu_p[:, :latent_dim]
    log_var = logvar_p[:, :latent_dim]
    return [recons, x, mu, log_var]


# ---------------------------------- main ------------------------------------

if __name__ == "__main__":
    B = 8          # batch (>= 2 so training-mode BatchNorm is well defined)
    IN_DIM = 32    # pcs_dim
    LATENT = 8

    root = jax.random.PRNGKey(0)
    k_params, k_x, k_eps = jax.random.split(root, 3)

    params = init_betavae_params(k_params, IN_DIM, LATENT)
    packed = pack_betavae_operands(params, IN_DIM, LATENT)   # once, at init

    x = jax.random.normal(k_x, (B, IN_DIM), jnp.float32)
    # Draw the noise already lane-padded: only the first LATENT columns are
    # the logical eps; the extra lanes are ignored by the kernel.
    eps = jax.random.normal(k_eps, (B, packed["lp"]), jnp.float32)

    recons, x_out, mu, log_var = betavae_forward(x, eps, packed)
    jax.block_until_ready((recons, x_out, mu, log_var))

    assert recons.shape == (B, IN_DIM)
    assert mu.shape == (B, LATENT) and log_var.shape == (B, LATENT)
    assert bool(jnp.all(jnp.isfinite(recons)))
    print("KERNEL_OK")
</pallas_src>

<mosaic_0001>
module attributes {stable_mosaic.version = 11 : i64} {
  func.func @kernel(%arg0: memref<8x32xf32, #tpu.memory_space<vmem>>, %arg1: memref<8x128xf32, #tpu.memory_space<vmem>>, %arg2: memref<32x256xbf16, #tpu.memory_space<vmem>>, %arg3: memref<256x128xbf16, #tpu.memory_space<vmem>>, %arg4: memref<128x128xbf16, #tpu.memory_space<vmem>>, %arg5: memref<128x256xbf16, #tpu.memory_space<vmem>>, %arg6: memref<128x128xbf16, #tpu.memory_space<vmem>>, %arg7: memref<128x128xbf16, #tpu.memory_space<vmem>>, %arg8: memref<128x256xbf16, #tpu.memory_space<vmem>>, %arg9: memref<256x128xbf16, #tpu.memory_space<vmem>>, %arg10: memref<24x256xf32, #tpu.memory_space<vmem>>, %arg11: memref<8x128xf32, #tpu.memory_space<vmem>>, %arg12: memref<8x128xf32, #tpu.memory_space<vmem>>, %arg13: memref<8x128xf32, #tpu.memory_space<vmem>>) attributes {dimension_semantics = [], scalar_prefetch = 0 : i64, scratch_operands = 0 : i64, tpu.core_type = #tpu.core_type<tc>} {
    %c0 = arith.constant 0 : index
    %c0_0 = arith.constant 0 : index
    %0 = vector.load %arg0[%c0, %c0_0] : memref<8x32xf32, #tpu.memory_space<vmem>>, vector<8x32xf32>
    %1 = arith.truncf %0 : vector<8x32xf32> to vector<8x32xbf16>
    %c0_1 = arith.constant 0 : index
    %c0_2 = arith.constant 0 : index
    %2 = vector.load %arg2[%c0_1, %c0_2] : memref<32x256xbf16, #tpu.memory_space<vmem>>, vector<32x256xbf16>
    %cst = arith.constant dense<0.000000e+00> : vector<8x256xf32>
    %3 = tpu.matmul %1, %2, %cst {dimension_numbers = #tpu.dot_dimension_numbers<[1], [0], [0], [1], [0, 0, 1, 1], [], []>} : vector<8x32xbf16>, vector<32x256xbf16>, vector<8x256xf32> -> vector<8x256xf32>
    %c0_3 = arith.constant 0 : index
    %c0_4 = arith.constant 0 : index
    %4 = vector.load %arg10[%c0_3, %c0_4] : memref<24x256xf32, #tpu.memory_space<vmem>>, vector<1x256xf32>
    %5 = vector.broadcast %4 : vector<1x256xf32> to vector<8x256xf32>
    %6 = arith.addf %3, %5 : vector<8x256xf32>
    %cst_5 = arith.constant dense<0.000000e+00> : vector<256xf32>
    %7 = vector.multi_reduction <add>, %6, %cst_5 [0] : vector<8x256xf32> to vector<256xf32>
    %8 = vector.shape_cast %7 : vector<256xf32> to vector<1x256xf32>
    %cst_6 = arith.constant 8.000000e+00 : f32
    %9 = vector.broadcast %cst_6 : f32 to vector<1x256xf32>
    %10 = arith.divf %8, %9 : vector<1x256xf32>
    %11 = vector.broadcast %10 : vector<1x256xf32> to vector<8x256xf32>
    %12 = arith.subf %6, %11 : vector<8x256xf32>
    %13 = arith.mulf %12, %12 : vector<8x256xf32>
    %cst_7 = arith.constant dense<0.000000e+00> : vector<256xf32>
    %14 = vector.multi_reduction <add>, %13, %cst_7 [0] : vector<8x256xf32> to vector<256xf32>
    %15 = vector.shape_cast %14 : vector<256xf32> to vector<1x256xf32>
    %cst_8 = arith.constant 8.000000e+00 : f32
    %16 = vector.broadcast %cst_8 : f32 to vector<1x256xf32>
    %17 = arith.divf %15, %16 : vector<1x256xf32>
    %c1 = arith.constant 1 : index
    %c0_9 = arith.constant 0 : index
    %18 = vector.load %arg10[%c1, %c0_9] : memref<24x256xf32, #tpu.memory_space<vmem>>, vector<1x256xf32>
    %cst_10 = arith.constant 9.99999974E-6 : f32
    %19 = vector.broadcast %cst_10 : f32 to vector<1x256xf32>
    %20 = arith.addf %17, %19 : vector<1x256xf32>
    %21 = math.rsqrt %20 : vector<1x256xf32>
    %22 = arith.mulf %18, %21 : vector<1x256xf32>
    %23 = vector.broadcast %22 : vector<1x256xf32> to vector<8x256xf32>
    %24 = arith.mulf %12, %23 : vector<8x256xf32>
    %c2 = arith.constant 2 : index
    %c0_11 = arith.constant 0 : index
    %25 = vector.load %arg10[%c2, %c0_11] : memref<24x256xf32, #tpu.memory_space<vmem>>, vector<1x256xf32>
    %26 = vector.broadcast %25 : vector<1x256xf32> to vector<8x256xf32>
    %27 = arith.addf %24, %26 : vector<8x256xf32>
    %cst_12 = arith.constant 0.00999999977 : f32
    %28 = vector.broadcast %cst_12 : f32 to vector<8x256xf32>
    %29 = arith.mulf %28, %27 : vector<8x256xf32>
    %30 = arith.maximumf %27, %29 : vector<8x256xf32>
    %31 = arith.truncf %30 : vector<8x256xf32> to vector<8x256xbf16>
    %c0_13 = arith.constant 0 : index
    %c0_14 = arith.constant 0 : index
    %32 = vector.load %arg3[%c0_13, %c0_14] : memref<256x128xbf16, #tpu.memory_space<vmem>>, vector<256x128xbf16>
    %cst_15 = arith.constant dense<0.000000e+00> : vector<8x128xf32>
    %33 = tpu.matmul %31, %32, %cst_15 {dimension_numbers = #tpu.dot_dimension_numbers<[1], [0], [0], [1], [0, 0, 1, 1], [], []>} : vector<8x256xbf16>, vector<256x128xbf16>, vector<8x128xf32> -> vector<8x128xf32>
    %c3 = arith.constant 3 : index
    %c0_16 = arith.constant 0 : index
    %34 = vector.load %arg10[%c3, %c0_16] : memref<24x256xf32, #tpu.memory_space<vmem>>, vector<1x128xf32>
    %35 = vector.broadcast %34 : vector<1x128xf32> to vector<8x128xf32>
    %36 = arith.addf %33, %35 : vector<8x128xf32>
    %cst_17 = arith.constant dense<0.000000e+00> : vector<128xf32>
    %37 = vector.multi_reduction <add>, %36, %cst_17 [0] : vector<8x128xf32> to vector<128xf32>
    %38 = vector.shape_cast %37 : vector<128xf32> to vector<1x128xf32>
    %cst_18 = arith.constant 8.000000e+00 : f32
    %39 = vector.broadcast %cst_18 : f32 to vector<1x128xf32>
    %40 = arith.divf %38, %39 : vector<1x128xf32>
    %41 = vector.broadcast %40 : vector<1x128xf32> to vector<8x128xf32>
    %42 = arith.subf %36, %41 : vector<8x128xf32>
    %43 = arith.mulf %42, %42 : vector<8x128xf32>
    %cst_19 = arith.constant dense<0.000000e+00> : vector<128xf32>
    %44 = vector.multi_reduction <add>, %43, %cst_19 [0] : vector<8x128xf32> to vector<128xf32>
    %45 = vector.shape_cast %44 : vector<128xf32> to vector<1x128xf32>
    %cst_20 = arith.constant 8.000000e+00 : f32
    %46 = vector.broadcast %cst_20 : f32 to vector<1x128xf32>
    %47 = arith.divf %45, %46 : vector<1x128xf32>
    %c4 = arith.constant 4 : index
    %c0_21 = arith.constant 0 : index
    %48 = vector.load %arg10[%c4, %c0_21] : memref<24x256xf32, #tpu.memory_space<vmem>>, vector<1x128xf32>
    %cst_22 = arith.constant 9.99999974E-6 : f32
    %49 = vector.broadcast %cst_22 : f32 to vector<1x128xf32>
    %50 = arith.addf %47, %49 : vector<1x128xf32>
    %51 = math.rsqrt %50 : vector<1x128xf32>
    %52 = arith.mulf %48, %51 : vector<1x128xf32>
    %53 = vector.broadcast %52 : vector<1x128xf32> to vector<8x128xf32>
    %54 = arith.mulf %42, %53 : vector<8x128xf32>
    %c5 = arith.constant 5 : index
    %c0_23 = arith.constant 0 : index
    %55 = vector.load %arg10[%c5, %c0_23] : memref<24x256xf32, #tpu.memory_space<vmem>>, vector<1x128xf32>
    %56 = vector.broadcast %55 : vector<1x128xf32> to vector<8x128xf32>
    %57 = arith.addf %54, %56 : vector<8x128xf32>
    %cst_24 = arith.constant 0.00999999977 : f32
    %58 = vector.broadcast %cst_24 : f32 to vector<8x128xf32>
    %59 = arith.mulf %58, %57 : vector<8x128xf32>
    %60 = arith.maximumf %57, %59 : vector<8x128xf32>
    %61 = arith.truncf %60 : vector<8x128xf32> to vector<8x128xbf16>
    %c0_25 = arith.constant 0 : index
    %c0_26 = arith.constant 0 : index
    %62 = vector.load %arg4[%c0_25, %c0_26] : memref<128x128xbf16, #tpu.memory_space<vmem>>, vector<128x128xbf16>
    %cst_27 = arith.constant dense<0.000000e+00> : vector<8x128xf32>
    %63 = tpu.matmul %61, %62, %cst_27 {dimension_numbers = #tpu.dot_dimension_numbers<[1], [0], [0], [1], [0, 0, 1, 1], [], []>} : vector<8x128xbf16>, vector<128x128xbf16>, vector<8x128xf32> -> vector<8x128xf32>
    %c6 = arith.constant 6 : index
    %c0_28 = arith.constant 0 : index
    %64 = vector.load %arg10[%c6, %c0_28] : memref<24x256xf32, #tpu.memory_space<vmem>>, vector<1x128xf32>
    %65 = vector.broadcast %64 : vector<1x128xf32> to vector<8x128xf32>
    %66 = arith.addf %63, %65 : vector<8x128xf32>
    %cst_29 = arith.constant dense<0.000000e+00> : vector<128xf32>
    %67 = vector.multi_reduction <add>, %66, %cst_29 [0] : vector<8x128xf32> to vector<128xf32>
    %68 = vector.shape_cast %67 : vector<128xf32> to vector<1x128xf32>
    %cst_30 = arith.constant 8.000000e+00 : f32
    %69 = vector.broadcast %cst_30 : f32 to vector<1x128xf32>
    %70 = arith.divf %68, %69 : vector<1x128xf32>
    %71 = vector.broadcast %70 : vector<1x128xf32> to vector<8x128xf32>
    %72 = arith.subf %66, %71 : vector<8x128xf32>
    %73 = arith.mulf %72, %72 : vector<8x128xf32>
    %cst_31 = arith.constant dense<0.000000e+00> : vector<128xf32>
    %74 = vector.multi_reduction <add>, %73, %cst_31 [0] : vector<8x128xf32> to vector<128xf32>
    %75 = vector.shape_cast %74 : vector<128xf32> to vector<1x128xf32>
    %cst_32 = arith.constant 8.000000e+00 : f32
    %76 = vector.broadcast %cst_32 : f32 to vector<1x128xf32>
    %77 = arith.divf %75, %76 : vector<1x128xf32>
    %c7 = arith.constant 7 : index
    %c0_33 = arith.constant 0 : index
    %78 = vector.load %arg10[%c7, %c0_33] : memref<24x256xf32, #tpu.memory_space<vmem>>, vector<1x128xf32>
    %cst_34 = arith.constant 9.99999974E-6 : f32
    %79 = vector.broadcast %cst_34 : f32 to vector<1x128xf32>
    %80 = arith.addf %77, %79 : vector<1x128xf32>
    %81 = math.rsqrt %80 : vector<1x128xf32>
    %82 = arith.mulf %78, %81 : vector<1x128xf32>
    %83 = vector.broadcast %82 : vector<1x128xf32> to vector<8x128xf32>
    %84 = arith.mulf %72, %83 : vector<8x128xf32>
    %c8 = arith.constant 8 : index
    %c0_35 = arith.constant 0 : index
    %85 = vector.load %arg10[%c8, %c0_35] : memref<24x256xf32, #tpu.memory_space<vmem>>, vector<1x128xf32>
    %86 = vector.broadcast %85 : vector<1x128xf32> to vector<8x128xf32>
    %87 = arith.addf %84, %86 : vector<8x128xf32>
    %cst_36 = arith.constant 0.00999999977 : f32
    %88 = vector.broadcast %cst_36 : f32 to vector<8x128xf32>
    %89 = arith.mulf %88, %87 : vector<8x128xf32>
    %90 = arith.maximumf %87, %89 : vector<8x128xf32>
    %91 = arith.truncf %90 : vector<8x128xf32> to vector<8x128xbf16>
    %c0_37 = arith.constant 0 : index
    %c0_38 = arith.constant 0 : index
    %92 = vector.load %arg5[%c0_37, %c0_38] : memref<128x256xbf16, #tpu.memory_space<vmem>>, vector<128x256xbf16>
    %cst_39 = arith.constant dense<0.000000e+00> : vector<8x256xf32>
    %93 = tpu.matmul %91, %92, %cst_39 {dimension_numbers = #tpu.dot_dimension_numbers<[1], [0], [0], [1], [0, 0, 1, 1], [], []>} : vector<8x128xbf16>, vector<128x256xbf16>, vector<8x256xf32> -> vector<8x256xf32>
    %c9 = arith.constant 9 : index
    %c0_40 = arith.constant 0 : index
    %94 = vector.load %arg10[%c9, %c0_40] : memref<24x256xf32, #tpu.memory_space<vmem>>, vector<1x256xf32>
    %95 = vector.broadcast %94 : vector<1x256xf32> to vector<8x256xf32>
    %96 = arith.addf %93, %95 : vector<8x256xf32>
    %97 = vector.extract_strided_slice %96 {offsets = [0, 0], sizes = [8, 128], strides = [1, 1]} : vector<8x256xf32> to vector<8x128xf32>
    %98 = vector.extract_strided_slice %96 {offsets = [0, 128], sizes = [8, 128], strides = [1, 1]} : vector<8x256xf32> to vector<8x128xf32>
    %c0_41 = arith.constant 0 : index
    %c0_42 = arith.constant 0 : index
    %99 = vector.load %arg1[%c0_41, %c0_42] : memref<8x128xf32, #tpu.memory_space<vmem>>, vector<8x128xf32>
    %cst_43 = arith.constant 5.000000e-01 : f32
    %100 = vector.broadcast %cst_43 : f32 to vector<8x128xf32>
    %101 = arith.mulf %100, %98 : vector<8x128xf32>
    %102 = math.exp %101 : vector<8x128xf32>
    %103 = arith.mulf %99, %102 : vector<8x128xf32>
    %104 = arith.addf %103, %97 : vector<8x128xf32>
    %105 = arith.truncf %104 : vector<8x128xf32> to vector<8x128xbf16>
    %c0_44 = arith.constant 0 : index
    %c0_45 = arith.constant 0 : index
    %106 = vector.load %arg6[%c0_44, %c0_45] : memref<128x128xbf16, #tpu.memory_space<vmem>>, vector<128x128xbf16>
    %cst_46 = arith.constant dense<0.000000e+00> : vector<8x128xf32>
    %107 = tpu.matmul %105, %106, %cst_46 {dimension_numbers = #tpu.dot_dimension_numbers<[1], [0], [0], [1], [0, 0, 1, 1], [], []>} : vector<8x128xbf16>, vector<128x128xbf16>, vector<8x128xf32> -> vector<8x128xf32>
    %c10 = arith.constant 10 : index
    %c0_47 = arith.constant 0 : index
    %108 = vector.load %arg10[%c10, %c0_47] : memref<24x256xf32, #tpu.memory_space<vmem>>, vector<1x128xf32>
    %109 = vector.broadcast %108 : vector<1x128xf32> to vector<8x128xf32>
    %110 = arith.addf %107, %109 : vector<8x128xf32>
    %111 = arith.truncf %110 : vector<8x128xf32> to vector<8x128xbf16>
    %c0_48 = arith.constant 0 : index
    %c0_49 = arith.constant 0 : index
    %112 = vector.load %arg7[%c0_48, %c0_49] : memref<128x128xbf16, #tpu.memory_space<vmem>>, vector<128x128xbf16>
    %cst_50 = arith.constant dense<0.000000e+00> : vector<8x128xf32>
    %113 = tpu.matmul %111, %112, %cst_50 {dimension_numbers = #tpu.dot_dimension_numbers<[1], [0], [0], [1], [0, 0, 1, 1], [], []>} : vector<8x128xbf16>, vector<128x128xbf16>, vector<8x128xf32> -> vector<8x128xf32>
    %c11 = arith.constant 11 : index
    %c0_51 = arith.constant 0 : index
    %114 = vector.load %arg10[%c11, %c0_51] : memref<24x256xf32, #tpu.memory_space<vmem>>, vector<1x128xf32>
    %115 = vector.broadcast %114 : vector<1x128xf32> to vector<8x128xf32>
    %116 = arith.addf %113, %115 : vector<8x128xf32>
    %cst_52 = arith.constant dense<0.000000e+00> : vector<128xf32>
    %117 = vector.multi_reduction <add>, %116, %cst_52 [0] : vector<8x128xf32> to vector<128xf32>
    %118 = vector.shape_cast %117 : vector<128xf32> to vector<1x128xf32>
    %cst_53 = arith.constant 8.000000e+00 : f32
    %119 = vector.broadcast %cst_53 : f32 to vector<1x128xf32>
    %120 = arith.divf %118, %119 : vector<1x128xf32>
    %121 = vector.broadcast %120 : vector<1x128xf32> to vector<8x128xf32>
    %122 = arith.subf %116, %121 : vector<8x128xf32>
    %123 = arith.mulf %122, %122 : vector<8x128xf32>
    %cst_54 = arith.constant dense<0.000000e+00> : vector<128xf32>
    %124 = vector.multi_reduction <add>, %123, %cst_54 [0] : vector<8x128xf32> to vector<128xf32>
    %125 = vector.shape_cast %124 : vector<128xf32> to vector<1x128xf32>
    %cst_55 = arith.constant 8.000000e+00 : f32
    %126 = vector.broadcast %cst_55 : f32 to vector<1x128xf32>
    %127 = arith.divf %125, %126 : vector<1x128xf32>
    %c12 = arith.constant 12 : index
    %c0_56 = arith.constant 0 : index
    %128 = vector.load %arg10[%c12, %c0_56] : memref<24x256xf32, #tpu.memory_space<vmem>>, vector<1x128xf32>
    %cst_57 = arith.constant 9.99999974E-6 : f32
    %129 = vector.broadcast %cst_57 : f32 to vector<1x128xf32>
    %130 = arith.addf %127, %129 : vector<1x128xf32>
    %131 = math.rsqrt %130 : vector<1x128xf32>
    %132 = arith.mulf %128, %131 : vector<1x128xf32>
    %133 = vector.broadcast %132 : vector<1x128xf32> to vector<8x128xf32>
    %134 = arith.mulf %122, %133 : vector<8x128xf32>
    %c13 = arith.constant 13 : index
    %c0_58 = arith.constant 0 : index
    %135 = vector.load %arg10[%c13, %c0_58] : memref<24x256xf32, #tpu.memory_space<vmem>>, vector<1x128xf32>
    %136 = vector.broadcast %135 : vector<1x128xf32> to vector<8x128xf32>
    %137 = arith.addf %134, %136 : vector<8x128xf32>
    %cst_59 = arith.constant 0.00999999977 : f32
    %138 = vector.broadcast %cst_59 : f32 to vector<8x128xf32>
    %139 = arith.mulf %138, %137 : vector<8x128xf32>
    %140 = arith.maximumf %137, %139 : vector<8x128xf32>
    %141 = arith.truncf %140 : vector<8x128xf32> to vector<8x128xbf16>
    %c0_60 = arith.constant 0 : index
    %c0_61 = arith.constant 0 : index
    %142 = vector.load %arg8[%c0_60, %c0_61] : memref<128x256xbf16, #tpu.memory_space<vmem>>, vector<128x256xbf16>
    %cst_62 = arith.constant dense<0.000000e+00> : vector<8x256xf32>
    %143 = tpu.matmul %141, %142, %cst_62 {dimension_numbers = #tpu.dot_dimension_numbers<[1], [0], [0], [1], [0, 0, 1, 1], [], []>} : vector<8x128xbf16>, vector<128x256xbf16>, vector<8x256xf32> -> vector<8x256xf32>
    %c14 = arith.constant 14 : index
    %c0_63 = arith.constant 0 : index
    %144 = vector.load %arg10[%c14, %c0_63] : memref<24x256xf32, #tpu.memory_space<vmem>>, vector<1x256xf32>
    %145 = vector.broadcast %144 : vector<1x256xf32> to vector<8x256xf32>
    %146 = arith.addf %143, %145 : vector<8x256xf32>
    %cst_64 = arith.constant dense<0.000000e+00> : vector<256xf32>
    %147 = vector.multi_reduction <add>, %146, %cst_64 [0] : vector<8x256xf32> to vector<256xf32>
    %148 = vector.shape_cast %147 : vector<256xf32> to vector<1x256xf32>
    %cst_65 = arith.constant 8.000000e+00 : f32
    %149 = vector.broadcast %cst_65 : f32 to vector<1x256xf32>
    %150 = arith.divf %148, %149 : vector<1x256xf32>
    %151 = vector.broadcast %150 : vector<1x256xf32> to vector<8x256xf32>
    %152 = arith.subf %146, %151 : vector<8x256xf32>
    %153 = arith.mulf %152, %152 : vector<8x256xf32>
    %cst_66 = arith.constant dense<0.000000e+00> : vector<256xf32>
    %154 = vector.multi_reduction <add>, %153, %cst_66 [0] : vector<8x256xf32> to vector<256xf32>
    %155 = vector.shape_cast %154 : vector<256xf32> to vector<1x256xf32>
    %cst_67 = arith.constant 8.000000e+00 : f32
    %156 = vector.broadcast %cst_67 : f32 to vector<1x256xf32>
    %157 = arith.divf %155, %156 : vector<1x256xf32>
    %c15 = arith.constant 15 : index
    %c0_68 = arith.constant 0 : index
    %158 = vector.load %arg10[%c15, %c0_68] : memref<24x256xf32, #tpu.memory_space<vmem>>, vector<1x256xf32>
    %cst_69 = arith.constant 9.99999974E-6 : f32
    %159 = vector.broadcast %cst_69 : f32 to vector<1x256xf32>
    %160 = arith.addf %157, %159 : vector<1x256xf32>
    %161 = math.rsqrt %160 : vector<1x256xf32>
    %162 = arith.mulf %158, %161 : vector<1x256xf32>
    %163 = vector.broadcast %162 : vector<1x256xf32> to vector<8x256xf32>
    %164 = arith.mulf %152, %163 : vector<8x256xf32>
    %c16 = arith.constant 16 : index
    %c0_70 = arith.constant 0 : index
    %165 = vector.load %arg10[%c16, %c0_70] : memref<24x256xf32, #tpu.memory_space<vmem>>, vector<1x256xf32>
    %166 = vector.broadcast %165 : vector<1x256xf32> to vector<8x256xf32>
    %167 = arith.addf %164, %166 : vector<8x256xf32>
    %cst_71 = arith.constant 0.00999999977 : f32
    %168 = vector.broadcast %cst_71 : f32 to vector<8x256xf32>
    %169 = arith.mulf %168, %167 : vector<8x256xf32>
    %170 = arith.maximumf %167, %169 : vector<8x256xf32>
    %171 = arith.truncf %170 : vector<8x256xf32> to vector<8x256xbf16>
    %c0_72 = arith.constant 0 : index
    %c0_73 = arith.constant 0 : index
    %172 = vector.load %arg9[%c0_72, %c0_73] : memref<256x128xbf16, #tpu.memory_space<vmem>>, vector<256x128xbf16>
    %cst_74 = arith.constant dense<0.000000e+00> : vector<8x128xf32>
    %173 = tpu.matmul %171, %172, %cst_74 {dimension_numbers = #tpu.dot_dimension_numbers<[1], [0], [0], [1], [0, 0, 1, 1], [], []>} : vector<8x256xbf16>, vector<256x128xbf16>, vector<8x128xf32> -> vector<8x128xf32>
    %c17 = arith.constant 17 : index
    %c0_75 = arith.constant 0 : index
    %174 = vector.load %arg10[%c17, %c0_75] : memref<24x256xf32, #tpu.memory_space<vmem>>, vector<1x128xf32>
    %175 = vector.broadcast %174 : vector<1x128xf32> to vector<8x128xf32>
    %176 = arith.addf %173, %175 : vector<8x128xf32>
    %c0_76 = arith.constant 0 : index
    %c0_77 = arith.constant 0 : index
    %177 = vector.load %arg11[%c0_76, %c0_77] : memref<8x128xf32, #tpu.memory_space<vmem>>, vector<8x128xf32>
    tpu.vector_store %arg11[%c0_76, %c0_77], %176 {strides = array<i32>} : memref<8x128xf32, #tpu.memory_space<vmem>>, vector<8x128xf32>,
    %c0_78 = arith.constant 0 : index
    %c0_79 = arith.constant 0 : index
    %178 = vector.load %arg12[%c0_78, %c0_79] : memref<8x128xf32, #tpu.memory_space<vmem>>, vector<8x128xf32>
    tpu.vector_store %arg12[%c0_78, %c0_79], %97 {strides = array<i32>} : memref<8x128xf32, #tpu.memory_space<vmem>>, vector<8x128xf32>,
    %c0_80 = arith.constant 0 : index
    %c0_81 = arith.constant 0 : index
    %179 = vector.load %arg13[%c0_80, %c0_81] : memref<8x128xf32, #tpu.memory_space<vmem>>, vector<8x128xf32>
    tpu.vector_store %arg13[%c0_80, %c0_81], %98 {strides = array<i32>} : memref<8x128xf32, #tpu.memory_space<vmem>>, vector<8x128xf32>,
    return
  }
}

</mosaic_0001>

<llo_original>
// kernel: tpu_custom_call.1
$region0: #{tpu_custom_call.1}
  #allocation0 [shape = 'u32[]', space=smem, size = 0x4, offset = 0x4, fixed_abs, tag = 'smem constant byte address 0x4 - core index']
  #allocation1 [shape = 'u32[72,128]{1,0:T(1,128)}', space=vmem, size = 0x9000, scoped, tag = 'internal scratch']
  %s0 = inlined_call_operand.hbm [shape: f32[8,32], index: 0, kind: input, shape index: {}]
  %s1 = inlined_call_operand.hbm [shape: f32[8,128], index: 1, kind: input, shape index: {}]
  %s2 = inlined_call_operand.hbm [shape: bf16[32,256], index: 2, kind: input, shape index: {}]
  %s3 = inlined_call_operand.hbm [shape: bf16[256,128], index: 3, kind: input, shape index: {}]
  %s4 = inlined_call_operand.hbm [shape: bf16[128,128], index: 4, kind: input, shape index: {}]
  %s5 = inlined_call_operand.hbm [shape: bf16[128,256], index: 5, kind: input, shape index: {}]
  %s6 = inlined_call_operand.hbm [shape: bf16[128,128], index: 6, kind: input, shape index: {}]
  %s7 = inlined_call_operand.hbm [shape: bf16[128,128], index: 7, kind: input, shape index: {}]
  %s8 = inlined_call_operand.hbm [shape: bf16[128,256], index: 8, kind: input, shape index: {}]
  %s9 = inlined_call_operand.hbm [shape: bf16[256,128], index: 9, kind: input, shape index: {}]
  %s10 = inlined_call_operand.hbm [shape: f32[24,256], index: 10, kind: input, shape index: {}]
  %s11 = inlined_call_operand.hbm [shape: f32[8,128], index: 11, kind: output, shape index: {0}]
  %s12 = inlined_call_operand.hbm [shape: f32[8,128], index: 12, kind: output, shape index: {1}]
  %s13 = inlined_call_operand.hbm [shape: f32[8,128], index: 13, kind: output, shape index: {2}]
  %14 = xla_tuple %s11, %s12, %s13
  %s15 = sld [smem:[#allocation0]]
  $region114: #{tpu_custom_call.1} parent=0
    _
  %s17 = ssub.s32 1, %s15
  %s18 = scalar_select 0, %s17, %s15
  $region1: #{tpu_custom_call.1} parent=0
    #allocation2 [shape = 'u8[4096]{0}', space=vmem, size = 0x1000, scoped, tag = 'input window, operand 0, single buffered']
    #allocation3 [shape = 's32[1]{0}', space=sflag, size = 0x4, scoped, tag = 'scoped memory for tpu_custom_call.1']
    #allocation4 [shape = 's32[1]{0}', space=sflag, size = 0x4, scoped, tag = 'scoped memory for tpu_custom_call.1']
    #allocation5 [shape = 'u8[4096]{0}', space=vmem, size = 0x1000, scoped, tag = 'input window, operand 1, single buffered']
    #allocation6 [shape = 's32[1]{0}', space=sflag, size = 0x4, scoped, tag = 'scoped memory for tpu_custom_call.1']
    #allocation7 [shape = 'u8[16384]{0}', space=vmem, size = 0x4000, scoped, tag = 'input window, operand 2, single buffered']
    #allocation8 [shape = 'u8[65536]{0}', space=vmem, size = 0x10000, scoped, tag = 'input window, operand 3, single buffered']
    #allocation9 [shape = 's32[1]{0}', space=sflag, size = 0x4, scoped, tag = 'scoped memory for tpu_custom_call.1']
    #allocation10 [shape = 'u8[32768]{0}', space=vmem, size = 0x8000, scoped, tag = 'input window, operand 4, single buffered']
    #allocation11 [shape = 'u8[65536]{0}', space=vmem, size = 0x10000, scoped, tag = 'input window, operand 5, single buffered']
    #allocation12 [shape = 's32[1]{0}', space=sflag, size = 0x4, scoped, tag = 'scoped memory for tpu_custom_call.1']
    #allocation13 [shape = 'u8[32768]{0}', space=vmem, size = 0x8000, scoped, tag = 'input window, operand 6, single buffered']
    #allocation14 [shape = 'u8[32768]{0}', space=vmem, size = 0x8000, scoped, tag = 'input window, operand 7, single buffered']
    #allocation15 [shape = 's32[1]{0}', space=sflag, size = 0x4, scoped, tag = 'scoped memory for tpu_custom_call.1']
    #allocation16 [shape = 'u8[65536]{0}', space=vmem, size = 0x10000, scoped, tag = 'input window, operand 8, single buffered']
    #allocation17 [shape = 'u8[65536]{0}', space=vmem, size = 0x10000, scoped, tag = 'input window, operand 9, single buffered']
    #allocation18 [shape = 's32[1]{0}', space=sflag, size = 0x4, scoped, tag = 'scoped memory for tpu_custom_call.1']
    #allocation19 [shape = 'u8[24576]{0}', space=vmem, size = 0x6000, scoped, tag = 'input window, operand 10, single buffered']
    #allocation20 [shape = 'u8[4096]{0}', space=vmem, size = 0x1000, scoped, tag = 'output window, operand 0, single buffered']
    #allocation21 [shape = 'u8[4096]{0}', space=vmem, size = 0x1000, scoped, tag = 'output window, operand 1, single buffered']
    #allocation22 [shape = 's32[1]{0}', space=sflag, size = 0x4, scoped, tag = 'scoped memory for tpu_custom_call.1']
    #allocation23 [shape = 'u8[4096]{0}', space=vmem, size = 0x1000, scoped, tag = 'output window, operand 2, single buffered']
    %19 = vsyncpa [#allocation3], 0
    %20 = vsyncpa [#allocation6], 0
    %21 = vsyncpa [#allocation9], 0
    %22 = vsyncpa [#allocation12], 0
    %23 = vsyncpa [#allocation15], 0
    %24 = vsyncpa [#allocation18], 0
    %25 = vsyncpa [#allocation4], 0
    %26 = vsyncpa [#allocation22], 0
    // Predicated region
    $region2: #{tpu_custom_call.1} parent=1 // pred_check
      _
    $region3: #{tpu_custom_call.1} parent=1 // pred_check_branch
      %28 = sbr.rel (0) target = $region5
    $region4: #{tpu_custom_call.1} parent=1 // pred_region
      %30 = vsyncadd [#allocation3], 0
      %s32 = sshll.u32 %s0, 4
      %s33 = int_to_ptr.hbm [resolvable:$true] %s32
      %s34 = sshll.u32 [#allocation2], 4
      %s35 = int_to_ptr.vmem [resolvable:$true] %s34
      %37 = dma.hbm_to_vmem [thread:$0]  %s33, 128, %s35, [#allocation3]
    $region5: #{tpu_custom_call.1} parent=1 // pred_fallthru
      _
    // Predicated region
    $region6: #{tpu_custom_call.1} parent=1 // pred_check
      _
    $region7: #{tpu_custom_call.1} parent=1 // pred_check_branch
      %39 = sbr.rel (0) target = $region9
    $region8: #{tpu_custom_call.1} parent=1 // pred_region
      %41 = vsyncadd [#allocation6], 0
      %s43 = sshll.u32 %s1, 4
      %s44 = int_to_ptr.hbm [resolvable:$true] %s43
      %s45 = sshll.u32 [#allocation5], 4
      %s46 = int_to_ptr.vmem [resolvable:$true] %s45
      %48 = dma.hbm_to_vmem [thread:$0]  %s44, 128, %s46, [#allocation6]
    $region9: #{tpu_custom_call.1} parent=1 // pred_fallthru
      _
    // Predicated region
    $region10: #{tpu_custom_call.1} parent=1 // pred_check
      _
    $region11: #{tpu_custom_call.1} parent=1 // pred_check_branch
      %50 = sbr.rel (0) target = $region13
    $region12: #{tpu_custom_call.1} parent=1 // pred_region
      %52 = vsyncadd [#allocation6], 0
      %s53 = sshll.u32 %s2, 4
      %s54 = int_to_ptr.hbm [resolvable:$true] %s53
      %s55 = sshll.u32 [#allocation7], 4
      %s56 = int_to_ptr.vmem [resolvable:$true] %s55
      %61 = dma.hbm_to_vmem [thread:$0]  %s54, 512, %s56, [#allocation6], 128, 128, 8
    $region13: #{tpu_custom_call.1} parent=1 // pred_fallthru
      _
    // Predicated region
    $region14: #{tpu_custom_call.1} parent=1 // pred_check
      _
    $region15: #{tpu_custom_call.1} parent=1 // pred_check_branch
      %63 = sbr.rel (0) target = $region17
    $region16: #{tpu_custom_call.1} parent=1 // pred_region
      %65 = vsyncadd [#allocation9], 0
      %s66 = sshll.u32 %s3, 4
      %s67 = int_to_ptr.hbm [resolvable:$true] %s66
      %s68 = sshll.u32 [#allocation8], 4
      %s69 = int_to_ptr.vmem [resolvable:$true] %s68
      %74 = dma.hbm_to_vmem [thread:$0]  %s67, 2048, %s69, [#allocation9], 64, 64, 4
    $region17: #{tpu_custom_call.1} parent=1 // pred_fallthru
      _
    // Predicated region
    $region18: #{tpu_custom_call.1} parent=1 // pred_check
      _
    $region19: #{tpu_custom_call.1} parent=1 // pred_check_branch
      %76 = sbr.rel (0) target = $region21
    $region20: #{tpu_custom_call.1} parent=1 // pred_region
      %78 = vsyncadd [#allocation9], 0
      %s79 = sshll.u32 %s4, 4
      %s80 = int_to_ptr.hbm [resolvable:$true] %s79
      %s81 = sshll.u32 [#allocation10], 4
      %s82 = int_to_ptr.vmem [resolvable:$true] %s81
      %87 = dma.hbm_to_vmem [thread:$0]  %s80, 1024, %s82, [#allocation9], 64, 64, 4
    $region21: #{tpu_custom_call.1} parent=1 // pred_fallthru
      _
    // Predicated region
    $region22: #{tpu_custom_call.1} parent=1 // pred_check
      _
    $region23: #{tpu_custom_call.1} parent=1 // pred_check_branch
      %89 = sbr.rel (0) target = $region25
    $region24: #{tpu_custom_call.1} parent=1 // pred_region
      %91 = vsyncadd [#allocation12], 0
      %s92 = sshll.u32 %s5, 4
      %s93 = int_to_ptr.hbm [resolvable:$true] %s92
      %s94 = sshll.u32 [#allocation11], 4
      %s95 = int_to_ptr.vmem [resolvable:$true] %s94
      %100 = dma.hbm_to_vmem [thread:$0]  %s93, 2048, %s95, [#allocation12], 128, 128, 8
    $region25: #{tpu_custom_call.1} parent=1 // pred_fallthru
      _
    // Predicated region
    $region26: #{tpu_custom_call.1} parent=1 // pred_check
      _
    $region27: #{tpu_custom_call.1} parent=1 // pred_check_branch
      %102 = sbr.rel (0) target = $region29
    $region28: #{tpu_custom_call.1} parent=1 // pred_region
      %104 = vsyncadd [#allocation12], 0
      %s105 = sshll.u32 %s6, 4
      %s106 = int_to_ptr.hbm [resolvable:$true] %s105
      %s107 = sshll.u32 [#allocation13], 4
      %s108 = int_to_ptr.vmem [resolvable:$true] %s107
      %113 = dma.hbm_to_vmem [thread:$0]  %s106, 1024, %s108, [#allocation12], 64, 64, 4
    $region29: #{tpu_custom_call.1} parent=1 // pred_fallthru
      _
    // Predicated region
    $region30: #{tpu_custom_call.1} parent=1 // pred_check
      _
    $region31: #{tpu_custom_call.1} parent=1 // pred_check_branch
      %115 = sbr.rel (0) target = $region33
    $region32: #{tpu_custom_call.1} parent=1 // pred_region
      %117 = vsyncadd [#allocation15], 0
      %s118 = sshll.u32 %s7, 4
      %s119 = int_to_ptr.hbm [resolvable:$true] %s118
      %s120 = sshll.u32 [#allocation14], 4
      %s121 = int_to_ptr.vmem [resolvable:$true] %s120
      %126 = dma.hbm_to_vmem [thread:$0]  %s119, 1024, %s121, [#allocation15], 64, 64, 4
    $region33: #{tpu_custom_call.1} parent=1 // pred_fallthru
      _
    // Predicated region
    $region34: #{tpu_custom_call.1} parent=1 // pred_check
      _
    $region35: #{tpu_custom_call.1} parent=1 // pred_check_branch
      %128 = sbr.rel (0) target = $region37
    $region36: #{tpu_custom_call.1} parent=1 // pred_region
      %130 = vsyncadd [#allocation15], 0
      %s131 = sshll.u32 %s8, 4
      %s132 = int_to_ptr.hbm [resolvable:$true] %s131
      %s133 = sshll.u32 [#allocation16], 4
      %s134 = int_to_ptr.vmem [resolvable:$true] %s133
      %139 = dma.hbm_to_vmem [thread:$0]  %s132, 2048, %s134, [#allocation15], 128, 128, 8
    $region37: #{tpu_custom_call.1} parent=1 // pred_fallthru
      _
    // Predicated region
    $region38: #{tpu_custom_call.1} parent=1 // pred_check
      _
    $region39: #{tpu_custom_call.1} parent=1 // pred_check_branch
      %141 = sbr.rel (0) target = $region41
    $region40: #{tpu_custom_call.1} parent=1 // pred_region
      %143 = vsyncadd [#allocation18], 0
      %s144 = sshll.u32 %s9, 4
      %s145 = int_to_ptr.hbm [resolvable:$true] %s144
      %s146 = sshll.u32 [#allocation17], 4
      %s147 = int_to_ptr.vmem [resolvable:$true] %s146
      %152 = dma.hbm_to_vmem [thread:$0]  %s145, 2048, %s147, [#allocation18], 64, 64, 4
    $region41: #{tpu_custom_call.1} parent=1 // pred_fallthru
      _
    // Predicated region
    $region42: #{tpu_custom_call.1} parent=1 // pred_check
      _
    $region43: #{tpu_custom_call.1} parent=1 // pred_check_branch
      %154 = sbr.rel (0) target = $region45
    $region44: #{tpu_custom_call.1} parent=1 // pred_region
      %156 = vsyncadd [#allocation18], 0
      %s157 = sshll.u32 %s10, 4
      %s158 = int_to_ptr.hbm [resolvable:$true] %s157
      %s159 = sshll.u32 [#allocation19], 4
      %s160 = int_to_ptr.vmem [resolvable:$true] %s159
      %165 = dma.hbm_to_vmem [thread:$0]  %s158, 768, %s160, [#allocation18], 256, 256, 16
    $region45: #{tpu_custom_call.1} parent=1 // pred_fallthru
      _
    // Predicated region
    $region46: #{tpu_custom_call.1} parent=1 // pred_check
      _
    $region47: #{tpu_custom_call.1} parent=1 // pred_check_branch
      %167 = sbr.rel (0) target = $region49
    $region48: #{tpu_custom_call.1} parent=1 // pred_region
      %169 = dma.done [#allocation3], 128
    $region49: #{tpu_custom_call.1} parent=1 // pred_fallthru
      _
    // Predicated region
    $region50: #{tpu_custom_call.1} parent=1 // pred_check
      _
    $region51: #{tpu_custom_call.1} parent=1 // pred_check_branch
      %171 = sbr.rel (0) target = $region53
    $region52: #{tpu_custom_call.1} parent=1 // pred_region
      %173 = dma.done [#allocation6], 128
    $region53: #{tpu_custom_call.1} parent=1 // pred_fallthru
      _
    // Predicated region
    $region54: #{tpu_custom_call.1} parent=1 // pred_check
      _
    $region55: #{tpu_custom_call.1} parent=1 // pred_check_branch
      %175 = sbr.rel (0) target = $region57
    $region56: #{tpu_custom_call.1} parent=1 // pred_region
      %177 = dma.done [#allocation6], 512
    $region57: #{tpu_custom_call.1} parent=1 // pred_fallthru
      _
    // Predicated region
    $region58: #{tpu_custom_call.1} parent=1 // pred_check
      _
    $region59: #{tpu_custom_call.1} parent=1 // pred_check_branch
      %179 = sbr.rel (0) target = $region61
    $region60: #{tpu_custom_call.1} parent=1 // pred_region
      %181 = dma.done [#allocation9], 2048
    $region61: #{tpu_custom_call.1} parent=1 // pred_fallthru
      _
    // Predicated region
    $region62: #{tpu_custom_call.1} parent=1 // pred_check
      _
    $region63: #{tpu_custom_call.1} parent=1 // pred_check_branch
      %183 = sbr.rel (0) target = $region65
    $region64: #{tpu_custom_call.1} parent=1 // pred_region
      %185 = dma.done [#allocation9], 1024
    $region65: #{tpu_custom_call.1} parent=1 // pred_fallthru
      _
    // Predicated region
    $region66: #{tpu_custom_call.1} parent=1 // pred_check
      _
    $region67: #{tpu_custom_call.1} parent=1 // pred_check_branch
      %187 = sbr.rel (0) target = $region69
    $region68: #{tpu_custom_call.1} parent=1 // pred_region
      %189 = dma.done [#allocation12], 2048
    $region69: #{tpu_custom_call.1} parent=1 // pred_fallthru
      _
    // Predicated region
    $region70: #{tpu_custom_call.1} parent=1 // pred_check
      _
    $region71: #{tpu_custom_call.1} parent=1 // pred_check_branch
      %191 = sbr.rel (0) target = $region73
    $region72: #{tpu_custom_call.1} parent=1 // pred_region
      %193 = dma.done [#allocation12], 1024
    $region73: #{tpu_custom_call.1} parent=1 // pred_fallthru
      _
    // Predicated region
    $region74: #{tpu_custom_call.1} parent=1 // pred_check
      _
    $region75: #{tpu_custom_call.1} parent=1 // pred_check_branch
      %195 = sbr.rel (0) target = $region77
    $region76: #{tpu_custom_call.1} parent=1 // pred_region
      %197 = dma.done [#allocation15], 1024
    $region77: #{tpu_custom_call.1} parent=1 // pred_fallthru
      _
    // Predicated region
    $region78: #{tpu_custom_call.1} parent=1 // pred_check
      _
    $region79: #{tpu_custom_call.1} parent=1 // pred_check_branch
      %199 = sbr.rel (0) target = $region81
    $region80: #{tpu_custom_call.1} parent=1 // pred_region
      %201 = dma.done [#allocation15], 2048
    $region81: #{tpu_custom_call.1} parent=1 // pred_fallthru
      _
    // Predicated region
    $region82: #{tpu_custom_call.1} parent=1 // pred_check
      _
    $region83: #{tpu_custom_call.1} parent=1 // pred_check_branch
      %203 = sbr.rel (0) target = $region85
    $region84: #{tpu_custom_call.1} parent=1 // pred_region
      %205 = dma.done [#allocation18], 2048
    $region85: #{tpu_custom_call.1} parent=1 // pred_fallthru
      _
    // Predicated region
    $region86: #{tpu_custom_call.1} parent=1 // pred_check
      _
    $region87: #{tpu_custom_call.1} parent=1 // pred_check_branch
      %207 = sbr.rel (0) target = $region89
    $region88: #{tpu_custom_call.1} parent=1 // pred_region
      %209 = dma.done [#allocation18], 768
    $region89: #{tpu_custom_call.1} parent=1 // pred_fallthru
      _
    %v211 = vld [vmem:[#allocation2] sm:$0xff]
    %v212 = vpack.c.bf16 %v211, %v211
    %v213 = vld [vmem:[#allocation7] sm:$0xff]
    %v214 = vld [vmem:[#allocation7 + $0x8] sm:$0xff]
    %v215 = vld [vmem:[#allocation7 + $0x10] sm:$0xff]
    %v216 = vld [vmem:[#allocation7 + $0x18] sm:$0xff]
    %v217 = vld [vmem:[#allocation19] ss:$8 sm:$0x3]
    %v219 = vperm.slane %v217, 0
    %v220 = vperm.slane %v217, 1
    %v227 = vunpack.c.l.b16 %v213
    %v228 = vunpack.c.h.b16 %v213
    %v229 = vunpack.c.l.b16 %v214
    %v230 = vunpack.c.h.b16 %v214
    %v231 = vunpack.c.l.b16 %v215
    %v232 = vunpack.c.h.b16 %v215
    %v233 = vunpack.c.l.b16 %v216
    %v234 = vunpack.c.h.b16 %v216
    %v235 = vpack.c.b16 %v229, %v227
    %v236 = vpack.c.b16 %v230, %v228
    %v237 = vpack.c.b16 %v233, %v231
    %v238 = vpack.c.b16 %v234, %v232
    %vm243 = vcmask 261120
    %v245 = vsel %vm243, %v212, 0
    %247 = vmatpush.bf16.msra.mxu0 0
    %248 = vmatpush.bf16.msra.mxu0 0
    %249 = vmatpush.bf16.msra.mxu0 0
    %250 = vmatpush.bf16.msra.mxu0 0
    %251 = vmatpush.bf16.msra.mxu0 0
    %252 = vmatpush.bf16.msra.mxu0 0
    %253 = vmatpush.bf16.msra.mxu0 %v237
    %254 = vmatpush.bf16.msra.mxu0 %v235
    %255 = vmatmul.bf16.gmra.mxu0 %v245
    %v256 = vpop.f32.mrf.mxu0
    %v257 = vadd.f32 %v219, %v256
    %v258 = vpop.f32.mrf.mxu0
    %259 = vdwg.mxu0
    %260 = vmatpush.bf16.msra.mxu0 0
    %261 = vmatpush.bf16.msra.mxu0 0
    %262 = vmatpush.bf16.msra.mxu0 0
    %263 = vmatpush.bf16.msra.mxu0 0
    %264 = vmatpush.bf16.msra.mxu0 0
    %265 = vmatpush.bf16.msra.mxu0 0
    %266 = vmatpush.bf16.msra.mxu0 %v238
    %267 = vmatpush.bf16.msra.mxu0 %v236
    %268 = vmatmul.bf16.gmra.mxu0 %v245
    %v269 = vpop.f32.mrf.mxu0
    %v270 = vadd.f32 %v220, %v269
    %v271 = vpop.f32.mrf.mxu0
    %272 = vdwg.mxu0
    %v273 = vrot.slane %v257, 4
    %v274 = vadd.f32 %v257, %v273
    %v275 = vrot.slane %v274, 2
    %v276 = vadd.f32 %v274, %v275
    %v277 = vrot.slane %v276, 1
    %v278 = vadd.f32 %v276, %v277
    %v279 = vrot.slane %v270, 4
    %v280 = vadd.f32 %v270, %v279
    %v281 = vrot.slane %v280, 2
    %v282 = vadd.f32 %v280, %v281
    %v283 = vrot.slane %v282, 1
    %v284 = vadd.f32 %v282, %v283
    %v285 = vrcp.pop 8.0
    %v286 = vmul.f32 8.0, %v285
    %v287 = vsub.f32 1.0, %v286
    %v288 = vmul.f32 %v285, %v287
    %v289 = vadd.f32 %v285, %v288
    %vm290 = vweird.f32 %v285
    %v291 = vsel %vm290, %v285, %v289
    %v292 = vmul.f32 %v278, %v291
    %v293 = vmul.f32 %v284, %v291
    %v294 = vsub.f32 %v257, %v292
    %v295 = vsub.f32 %v270, %v293
    %v296 = vmul.f32 %v294, %v294
    %v297 = vmul.f32 %v295, %v295
    %v298 = vrot.slane %v296, 4
    %v299 = vadd.f32 %v296, %v298
    %v300 = vrot.slane %v299, 2
    %v301 = vadd.f32 %v299, %v300
    %v302 = vrot.slane %v301, 1
    %v303 = vadd.f32 %v301, %v302
    %v304 = vrot.slane %v297, 4
    %v305 = vadd.f32 %v297, %v304
    %v306 = vrot.slane %v305, 2
    %v307 = vadd.f32 %v305, %v306
    %v308 = vrot.slane %v307, 1
    %v309 = vadd.f32 %v307, %v308
    %v310 = vmul.f32 %v303, %v291
    %v311 = vmul.f32 %v309, %v291
    %s312 = scalar_lea.vmem [#allocation19], 1
    %v313 = vld [vmem:[%s312] ss:$8 sm:$0x3]
    %v314 = vadd.f32 %v310, 1e-05
    %v315 = vadd.f32 %v311, 1e-05
    %v316 = vrsqrt.pop %v314
    %v317 = vmul.f32 %v316, %v314
    %v318 = vmul.f32 %v317, %v316
    %v319 = vmul.f32 0.5, %v318
    %v320 = vsub.f32 1.5, %v319
    %v321 = vmul.f32 %v316, %v320
    %vm322 = vweird.f32 %v314
    %vm323 = vweird.f32 %v316
    %vm324 = vmor %vm322, %vm323
    %v325 = vsel %vm324, %v316, %v321
    %v326 = vrsqrt.pop %v315
    %v327 = vmul.f32 %v326, %v315
    %v328 = vmul.f32 %v327, %v326
    %v329 = vmul.f32 0.5, %v328
    %v330 = vsub.f32 1.5, %v329
    %v331 = vmul.f32 %v326, %v330
    %vm332 = vweird.f32 %v315
    %vm333 = vweird.f32 %v326
    %vm334 = vmor %vm332, %vm333
    %v335 = vsel %vm334, %v326, %v331
    %v338 = vrot.slane %v335, 7
    %vm339 = vcmask 1040384
    %v340 = vsel %vm339, %v325, %v338
    %v342 = vmul.f32 %v313, %v340
    %v344 = vperm.slane %v342, 0
    %v345 = vperm.slane %v342, 1
    %v348 = vmul.f32 %v294, %v344
    %v349 = vmul.f32 %v295, %v345
    %s350 = scalar_lea.vmem [#allocation19], 2
    %v351 = vld [vmem:[%s350] ss:$8 sm:$0x3]
    %v353 = vperm.slane %v351, 0
    %v354 = vperm.slane %v351, 1
    %v357 = vadd.f32 %v348, %v353
    %v358 = vadd.f32 %v349, %v354
    %v359 = vmul.f32 %v357, 0.01
    %v360 = vmul.f32 %v358, 0.01
    %v361 = vmax.f32 %v357, %v359
    %v362 = vmax.f32 %v358, %v360
    %v363 = vpack.c.bf16 %v361, %v361
    %v364 = vpack.c.bf16 %v362, %v362
    %v365 = vld [vmem:[#allocation8] sm:$0xf]
    %v366 = vld [vmem:[#allocation8 + $0x4] sm:$0xf]
    %v367 = vld [vmem:[#allocation8 + $0x8] sm:$0xf]
    %v368 = vld [vmem:[#allocation8 + $0xc] sm:$0xf]
    %v369 = vld [vmem:[#allocation8 + $0x10] sm:$0xf]
    %v370 = vld [vmem:[#allocation8 + $0x14] sm:$0xf]
    %v371 = vld [vmem:[#allocation8 + $0x18] sm:$0xf]
    %v372 = vld [vmem:[#allocation8 + $0x1c] sm:$0xf]
    %v373 = vld [vmem:[#allocation8 + $0x20] sm:$0xf]
    %v374 = vld [vmem:[#allocation8 + $0x24] sm:$0xf]
    %v375 = vld [vmem:[#allocation8 + $0x28] sm:$0xf]
    %v376 = vld [vmem:[#allocation8 + $0x2c] sm:$0xf]
    %v377 = vld [vmem:[#allocation8 + $0x30] sm:$0xf]
    %v378 = vld [vmem:[#allocation8 + $0x34] sm:$0xf]
    %v379 = vld [vmem:[#allocation8 + $0x38] sm:$0xf]
    %v380 = vld [vmem:[#allocation8 + $0x3c] sm:$0xf]
    %v381 = vld [vmem:[#allocation8 + $0x40] sm:$0xf]
    %v382 = vld [vmem:[#allocation8 + $0x44] sm:$0xf]
    %v383 = vld [vmem:[#allocation8 + $0x48] sm:$0xf]
    %v384 = vld [vmem:[#allocation8 + $0x4c] sm:$0xf]
    %v385 = vld [vmem:[#allocation8 + $0x50] sm:$0xf]
    %v386 = vld [vmem:[#allocation8 + $0x54] sm:$0xf]
    %v387 = vld [vmem:[#allocation8 + $0x58] sm:$0xf]
    %v388 = vld [vmem:[#allocation8 + $0x5c] sm:$0xf]
    %v389 = vld [vmem:[#allocation8 + $0x60] sm:$0xf]
    %v390 = vld [vmem:[#allocation8 + $0x64] sm:$0xf]
    %v391 = vld [vmem:[#allocation8 + $0x68] sm:$0xf]
    %v392 = vld [vmem:[#allocation8 + $0x6c] sm:$0xf]
    %v393 = vld [vmem:[#allocation8 + $0x70] sm:$0xf]
    %v394 = vld [vmem:[#allocation8 + $0x74] sm:$0xf]
    %v395 = vld [vmem:[#allocation8 + $0x78] sm:$0xf]
    %v396 = vld [vmem:[#allocation8 + $0x7c] sm:$0xf]
    %v397 = vld [vmem:[#allocation19 + $0x3] ss:$0 sm:$0xff]
    %v430 = vunpack.c.l.b16 %v365
    %v431 = vunpack.c.l.b16 %v366
    %v432 = vunpack.c.l.b16 %v367
    %v433 = vunpack.c.l.b16 %v368
    %v434 = vunpack.c.l.b16 %v369
    %v435 = vunpack.c.l.b16 %v370
    %v436 = vunpack.c.l.b16 %v371
    %v437 = vunpack.c.l.b16 %v372
    %v438 = vunpack.c.l.b16 %v373
    %v439 = vunpack.c.l.b16 %v374
    %v440 = vunpack.c.l.b16 %v375
    %v441 = vunpack.c.l.b16 %v376
    %v442 = vunpack.c.l.b16 %v377
    %v443 = vunpack.c.l.b16 %v378
    %v444 = vunpack.c.l.b16 %v379
    %v445 = vunpack.c.l.b16 %v380
    %v446 = vunpack.c.l.b16 %v381
    %v447 = vunpack.c.l.b16 %v382
    %v448 = vunpack.c.l.b16 %v383
    %v449 = vunpack.c.l.b16 %v384
    %v450 = vunpack.c.l.b16 %v385
    %v451 = vunpack.c.l.b16 %v386
    %v452 = vunpack.c.l.b16 %v387
    %v453 = vunpack.c.l.b16 %v388
    %v454 = vunpack.c.l.b16 %v389
    %v455 = vunpack.c.l.b16 %v390
    %v456 = vunpack.c.l.b16 %v391
    %v457 = vunpack.c.l.b16 %v392
    %v458 = vunpack.c.l.b16 %v393
    %v459 = vunpack.c.l.b16 %v394
    %v460 = vunpack.c.l.b16 %v395
    %v461 = vunpack.c.l.b16 %v396
    %v462 = vpack.c.b16 %v431, %v430
    %v463 = vpack.c.b16 %v433, %v432
    %v464 = vpack.c.b16 %v435, %v434
    %v465 = vpack.c.b16 %v437, %v436
    %v466 = vpack.c.b16 %v439, %v438
    %v467 = vpack.c.b16 %v441, %v440
    %v468 = vpack.c.b16 %v443, %v442
    %v469 = vpack.c.b16 %v445, %v444
    %v470 = vpack.c.b16 %v447, %v446
    %v471 = vpack.c.b16 %v449, %v448
    %v472 = vpack.c.b16 %v451, %v450
    %v473 = vpack.c.b16 %v453, %v452
    %v474 = vpack.c.b16 %v455, %v454
    %v475 = vpack.c.b16 %v457, %v456
    %v476 = vpack.c.b16 %v459, %v458
    %v477 = vpack.c.b16 %v461, %v460
    %494 = vmatpush.bf16.msra.mxu0 %v469
    %495 = vmatpush.bf16.msra.mxu0 %v468
    %496 = vmatpush.bf16.msra.mxu0 %v467
    %497 = vmatpush.bf16.msra.mxu0 %v466
    %498 = vmatpush.bf16.msra.mxu0 %v465
    %499 = vmatpush.bf16.msra.mxu0 %v464
    %500 = vmatpush.bf16.msra.mxu0 %v463
    %501 = vmatpush.bf16.msra.mxu0 %v462
    %502 = vmatmul.bf16.gmra.mxu0 %v363
    %v503 = vpop.f32.mrf.mxu0
    %v504 = vadd.f32 %v397, %v503
    %v505 = vpop.f32.mrf.mxu0
    %506 = vdwg.mxu0
    %507 = vmatpush.bf16.msra.mxu0 %v477
    %508 = vmatpush.bf16.msra.mxu0 %v476
    %509 = vmatpush.bf16.msra.mxu0 %v475
    %510 = vmatpush.bf16.msra.mxu0 %v474
    %511 = vmatpush.bf16.msra.mxu0 %v473
    %512 = vmatpush.bf16.msra.mxu0 %v472
    %513 = vmatpush.bf16.msra.mxu0 %v471
    %514 = vmatpush.bf16.msra.mxu0 %v470
    %515 = vmatmul.bf16.gmra.mxu0 %v364
    %v516 = vpop.f32.mrf.mxu0
    %v517 = vadd.f32 %v504, %v516
    %v518 = vpop.f32.mrf.mxu0
    %519 = vdwg.mxu0
    %v520 = vrot.slane %v517, 4
    %v521 = vadd.f32 %v517, %v520
    %v522 = vrot.slane %v521, 2
    %v523 = vadd.f32 %v521, %v522
    %v524 = vrot.slane %v523, 1
    %v525 = vadd.f32 %v523, %v524
    %v526 = vmul.f32 %v525, %v291
    %v527 = vsub.f32 %v517, %v526
    %v528 = vmul.f32 %v527, %v527
    %v529 = vrot.slane %v528, 4
    %v530 = vadd.f32 %v528, %v529
    %v531 = vrot.slane %v530, 2
    %v532 = vadd.f32 %v530, %v531
    %v533 = vrot.slane %v532, 1
    %v534 = vadd.f32 %v532, %v533
    %v535 = vmul.f32 %v534, %v291
    %v536 = vld [vmem:[#allocation19 + $0x4] ss:$0 sm:$0xff]
    %v537 = vadd.f32 %v535, 1e-05
    %v538 = vrsqrt.pop %v537
    %v539 = vmul.f32 %v538, %v537
    %v540 = vmul.f32 %v539, %v538
    %v541 = vmul.f32 0.5, %v540
    %v542 = vsub.f32 1.5, %v541
    %v543 = vmul.f32 %v538, %v542
    %vm544 = vweird.f32 %v537
    %vm545 = vweird.f32 %v538
    %vm546 = vmor %vm544, %vm545
    %v547 = vsel %vm546, %v538, %v543
    %v548 = vmul.f32 %v536, %v547
    %v549 = vmul.f32 %v527, %v548
    %v550 = vld [vmem:[#allocation19 + $0x5] ss:$0 sm:$0xff]
    %v551 = vadd.f32 %v549, %v550
    %v552 = vmul.f32 %v551, 0.01
    %v553 = vmax.f32 %v551, %v552
    %v554 = vpack.c.bf16 %v553, %v553
    %v555 = vld [vmem:[#allocation10] sm:$0xf]
    %v556 = vld [vmem:[#allocation10 + $0x4] sm:$0xf]
    %v557 = vld [vmem:[#allocation10 + $0x8] sm:$0xf]
    %v558 = vld [vmem:[#allocation10 + $0xc] sm:$0xf]
    %v559 = vld [vmem:[#allocation10 + $0x10] sm:$0xf]
    %v560 = vld [vmem:[#allocation10 + $0x14] sm:$0xf]
    %v561 = vld [vmem:[#allocation10 + $0x18] sm:$0xf]
    %v562 = vld [vmem:[#allocation10 + $0x1c] sm:$0xf]
    %v563 = vld [vmem:[#allocation10 + $0x20] sm:$0xf]
    %v564 = vld [vmem:[#allocation10 + $0x24] sm:$0xf]
    %v565 = vld [vmem:[#allocation10 + $0x28] sm:$0xf]
    %v566 = vld [vmem:[#allocation10 + $0x2c] sm:$0xf]
    %v567 = vld [vmem:[#allocation10 + $0x30] sm:$0xf]
    %v568 = vld [vmem:[#allocation10 + $0x34] sm:$0xf]
    %v569 = vld [vmem:[#allocation10 + $0x38] sm:$0xf]
    %v570 = vld [vmem:[#allocation10 + $0x3c] sm:$0xf]
    %v571 = vld [vmem:[#allocation19 + $0x6] ss:$0 sm:$0xff]
    %v588 = vunpack.c.l.b16 %v555
    %v589 = vunpack.c.l.b16 %v556
    %v590 = vunpack.c.l.b16 %v557
    %v591 = vunpack.c.l.b16 %v558
    %v592 = vunpack.c.l.b16 %v559
    %v593 = vunpack.c.l.b16 %v560
    %v594 = vunpack.c.l.b16 %v561
    %v595 = vunpack.c.l.b16 %v562
    %v596 = vunpack.c.l.b16 %v563
    %v597 = vunpack.c.l.b16 %v564
    %v598 = vunpack.c.l.b16 %v565
    %v599 = vunpack.c.l.b16 %v566
    %v600 = vunpack.c.l.b16 %v567
    %v601 = vunpack.c.l.b16 %v568
    %v602 = vunpack.c.l.b16 %v569
    %v603 = vunpack.c.l.b16 %v570
    %v604 = vpack.c.b16 %v589, %v588
    %v605 = vpack.c.b16 %v591, %v590
    %v606 = vpack.c.b16 %v593, %v592
    %v607 = vpack.c.b16 %v595, %v594
    %v608 = vpack.c.b16 %v597, %v596
    %v609 = vpack.c.b16 %v599, %v598
    %v610 = vpack.c.b16 %v601, %v600
    %v611 = vpack.c.b16 %v603, %v602
    %620 = vmatpush.bf16.msra.mxu0 %v611
    %621 = vmatpush.bf16.msra.mxu0 %v610
    %622 = vmatpush.bf16.msra.mxu0 %v609
    %623 = vmatpush.bf16.msra.mxu0 %v608
    %624 = vmatpush.bf16.msra.mxu0 %v607
    %625 = vmatpush.bf16.msra.mxu0 %v606
    %626 = vmatpush.bf16.msra.mxu0 %v605
    %627 = vmatpush.bf16.msra.mxu0 %v604
    %628 = vmatmul.bf16.gmra.mxu0 %v554
    %v629 = vpop.f32.mrf.mxu0
    %v630 = vadd.f32 %v571, %v629
    %v631 = vpop.f32.mrf.mxu0
    %632 = vdwg.mxu0
    %v633 = vrot.slane %v630, 4
    %v634 = vadd.f32 %v630, %v633
    %v635 = vrot.slane %v634, 2
    %v636 = vadd.f32 %v634, %v635
    %v637 = vrot.slane %v636, 1
    %v638 = vadd.f32 %v636, %v637
    %v639 = vmul.f32 %v638, %v291
    %v640 = vsub.f32 %v630, %v639
    %v641 = vmul.f32 %v640, %v640
    %v642 = vrot.slane %v641, 4
    %v643 = vadd.f32 %v641, %v642
    %v644 = vrot.slane %v643, 2
    %v645 = vadd.f32 %v643, %v644
    %v646 = vrot.slane %v645, 1
    %v647 = vadd.f32 %v645, %v646
    %v648 = vmul.f32 %v647, %v291
    %v649 = vld [vmem:[#allocation19 + $0x7] ss:$0 sm:$0xff]
    %v650 = vadd.f32 %v648, 1e-05
    %v651 = vrsqrt.pop %v650
    %v652 = vmul.f32 %v651, %v650
    %v653 = vmul.f32 %v652, %v651
    %v654 = vmul.f32 0.5, %v653
    %v655 = vsub.f32 1.5, %v654
    %v656 = vmul.f32 %v651, %v655
    %vm657 = vweird.f32 %v650
    %vm658 = vweird.f32 %v651
    %vm659 = vmor %vm657, %vm658
    %v660 = vsel %vm659, %v651, %v656
    %v661 = vmul.f32 %v649, %v660
    %v662 = vmul.f32 %v640, %v661
    %v663 = vld [vmem:[#allocation19 + $0x10] ss:$0 sm:$0xff]
    %v664 = vadd.f32 %v662, %v663
    %v665 = vmul.f32 %v664, 0.01
    %v666 = vmax.f32 %v664, %v665
    %v667 = vpack.c.bf16 %v666, %v666
    %v668 = vld [vmem:[#allocation11] sm:$0xff]
    %v669 = vld [vmem:[#allocation11 + $0x8] sm:$0xff]
    %v670 = vld [vmem:[#allocation11 + $0x10] sm:$0xff]
    %v671 = vld [vmem:[#allocation11 + $0x18] sm:$0xff]
    %v672 = vld [vmem:[#allocation11 + $0x20] sm:$0xff]
    %v673 = vld [vmem:[#allocation11 + $0x28] sm:$0xff]
    %v674 = vld [vmem:[#allocation11 + $0x30] sm:$0xff]
    %v675 = vld [vmem:[#allocation11 + $0x38] sm:$0xff]
    %v676 = vld [vmem:[#allocation11 + $0x40] sm:$0xff]
    %v677 = vld [vmem:[#allocation11 + $0x48] sm:$0xff]
    %v678 = vld [vmem:[#allocation11 + $0x50] sm:$0xff]
    %v679 = vld [vmem:[#allocation11 + $0x58] sm:$0xff]
    %v680 = vld [vmem:[#allocation11 + $0x60] sm:$0xff]
    %v681 = vld [vmem:[#allocation11 + $0x68] sm:$0xff]
    %v682 = vld [vmem:[#allocation11 + $0x70] sm:$0xff]
    %v683 = vld [vmem:[#allocation11 + $0x78] sm:$0xff]
    %s684 = scalar_lea.vmem [#allocation19], 17
    %v685 = vld [vmem:[%s684] ss:$8 sm:$0x3]
    %v687 = vperm.slane %v685, 0
    %v688 = vperm.slane %v685, 1
    %v707 = vunpack.c.l.b16 %v668
    %v708 = vunpack.c.h.b16 %v668
    %v709 = vunpack.c.l.b16 %v669
    %v710 = vunpack.c.h.b16 %v669
    %v711 = vunpack.c.l.b16 %v670
    %v712 = vunpack.c.h.b16 %v670
    %v713 = vunpack.c.l.b16 %v671
    %v714 = vunpack.c.h.b16 %v671
    %v715 = vunpack.c.l.b16 %v672
    %v716 = vunpack.c.h.b16 %v672
    %v717 = vunpack.c.l.b16 %v673
    %v718 = vunpack.c.h.b16 %v673
    %v719 = vunpack.c.l.b16 %v674
    %v720 = vunpack.c.h.b16 %v674
    %v721 = vunpack.c.l.b16 %v675
    %v722 = vunpack.c.h.b16 %v675
    %v723 = vunpack.c.l.b16 %v676
    %v724 = vunpack.c.h.b16 %v676
    %v725 = vunpack.c.l.b16 %v677
    %v726 = vunpack.c.h.b16 %v677
    %v727 = vunpack.c.l.b16 %v678
    %v728 = vunpack.c.h.b16 %v678
    %v729 = vunpack.c.l.b16 %v679
    %v730 = vunpack.c.h.b16 %v679
    %v731 = vunpack.c.l.b16 %v680
    %v732 = vunpack.c.h.b16 %v680
    %v733 = vunpack.c.l.b16 %v681
    %v734 = vunpack.c.h.b16 %v681
    %v735 = vunpack.c.l.b16 %v682
    %v736 = vunpack.c.h.b16 %v682
    %v737 = vunpack.c.l.b16 %v683
    %v738 = vunpack.c.h.b16 %v683
    %v739 = vpack.c.b16 %v709, %v707
    %v740 = vpack.c.b16 %v710, %v708
    %v741 = vpack.c.b16 %v713, %v711
    %v742 = vpack.c.b16 %v714, %v712
    %v743 = vpack.c.b16 %v717, %v715
    %v744 = vpack.c.b16 %v718, %v716
    %v745 = vpack.c.b16 %v721, %v719
    %v746 = vpack.c.b16 %v722, %v720
    %v747 = vpack.c.b16 %v725, %v723
    %v748 = vpack.c.b16 %v726, %v724
    %v749 = vpack.c.b16 %v729, %v727
    %v750 = vpack.c.b16 %v730, %v728
    %v751 = vpack.c.b16 %v733, %v731
    %v752 = vpack.c.b16 %v734, %v732
    %v753 = vpack.c.b16 %v737, %v735
    %v754 = vpack.c.b16 %v738, %v736
    %771 = vmatpush.bf16.msra.mxu0 %v753
    %772 = vmatpush.bf16.msra.mxu0 %v751
    %773 = vmatpush.bf16.msra.mxu0 %v749
    %774 = vmatpush.bf16.msra.mxu0 %v747
    %775 = vmatpush.bf16.msra.mxu0 %v745
    %776 = vmatpush.bf16.msra.mxu0 %v743
    %777 = vmatpush.bf16.msra.mxu0 %v741
    %778 = vmatpush.bf16.msra.mxu0 %v739
    %779 = vmatmul.bf16.gmra.mxu0 %v667
    %v780 = vpop.f32.mrf.mxu0
    %v781 = vadd.f32 %v687, %v780
    %v782 = vpop.f32.mrf.mxu0
    %783 = vdwg.mxu0
    %784 = vmatpush.bf16.msra.mxu0 %v754
    %785 = vmatpush.bf16.msra.mxu0 %v752
    %786 = vmatpush.bf16.msra.mxu0 %v750
    %787 = vmatpush.bf16.msra.mxu0 %v748
    %788 = vmatpush.bf16.msra.mxu0 %v746
    %789 = vmatpush.bf16.msra.mxu0 %v744
    %790 = vmatpush.bf16.msra.mxu0 %v742
    %791 = vmatpush.bf16.msra.mxu0 %v740
    %792 = vmatmul.bf16.gmra.mxu0 %v667
    %v793 = vpop.f32.mrf.mxu0
    %v794 = vadd.f32 %v688, %v793
    %v795 = vpop.f32.mrf.mxu0
    %796 = vdwg.mxu0
    %v797 = vld [vmem:[#allocation5] sm:$0xff]
    %v798 = vmul.f32 %v794, 0.5
    %v799 = vmul.f32 %v798, 1.442695
    %v800 = vpow.pop %v799
    %v801 = vmul.f32 %v797, %v800
    %v802 = vadd.f32 %v801, %v781
    %v803 = vpack.c.bf16 %v802, %v802
    %v804 = vld [vmem:[#allocation13] sm:$0xf]
    %v805 = vld [vmem:[#allocation13 + $0x4] sm:$0xf]
    %v806 = vld [vmem:[#allocation13 + $0x8] sm:$0xf]
    %v807 = vld [vmem:[#allocation13 + $0xc] sm:$0xf]
    %v808 = vld [vmem:[#allocation13 + $0x10] sm:$0xf]
    %v809 = vld [vmem:[#allocation13 + $0x14] sm:$0xf]
    %v810 = vld [vmem:[#allocation13 + $0x18] sm:$0xf]
    %v811 = vld [vmem:[#allocation13 + $0x1c] sm:$0xf]
    %v812 = vld [vmem:[#allocation13 + $0x20] sm:$0xf]
    %v813 = vld [vmem:[#allocation13 + $0x24] sm:$0xf]
    %v814 = vld [vmem:[#allocation13 + $0x28] sm:$0xf]
    %v815 = vld [vmem:[#allocation13 + $0x2c] sm:$0xf]
    %v816 = vld [vmem:[#allocation13 + $0x30] sm:$0xf]
    %v817 = vld [vmem:[#allocation13 + $0x34] sm:$0xf]
    %v818 = vld [vmem:[#allocation13 + $0x38] sm:$0xf]
    %v819 = vld [vmem:[#allocation13 + $0x3c] sm:$0xf]
    %v820 = vld [vmem:[#allocation19 + $0x12] ss:$0 sm:$0xff]
    %v837 = vunpack.c.l.b16 %v804
    %v838 = vunpack.c.l.b16 %v805
    %v839 = vunpack.c.l.b16 %v806
    %v840 = vunpack.c.l.b16 %v807
    %v841 = vunpack.c.l.b16 %v808
    %v842 = vunpack.c.l.b16 %v809
    %v843 = vunpack.c.l.b16 %v810
    %v844 = vunpack.c.l.b16 %v811
    %v845 = vunpack.c.l.b16 %v812
    %v846 = vunpack.c.l.b16 %v813
    %v847 = vunpack.c.l.b16 %v814
    %v848 = vunpack.c.l.b16 %v815
    %v849 = vunpack.c.l.b16 %v816
    %v850 = vunpack.c.l.b16 %v817
    %v851 = vunpack.c.l.b16 %v818
    %v852 = vunpack.c.l.b16 %v819
    %v853 = vpack.c.b16 %v838, %v837
    %v854 = vpack.c.b16 %v840, %v839
    %v855 = vpack.c.b16 %v842, %v841
    %v856 = vpack.c.b16 %v844, %v843
    %v857 = vpack.c.b16 %v846, %v845
    %v858 = vpack.c.b16 %v848, %v847
    %v859 = vpack.c.b16 %v850, %v849
    %v860 = vpack.c.b16 %v852, %v851
    %869 = vmatpush.bf16.msra.mxu0 %v860
    %870 = vmatpush.bf16.msra.mxu0 %v859
    %871 = vmatpush.bf16.msra.mxu0 %v858
    %872 = vmatpush.bf16.msra.mxu0 %v857
    %873 = vmatpush.bf16.msra.mxu0 %v856
    %874 = vmatpush.bf16.msra.mxu0 %v855
    %875 = vmatpush.bf16.msra.mxu0 %v854
    %876 = vmatpush.bf16.msra.mxu0 %v853
    %877 = vmatmul.bf16.gmra.mxu0 %v803
    %v878 = vpop.f32.mrf.mxu0
    %v879 = vadd.f32 %v820, %v878
    %v880 = vpop.f32.mrf.mxu0
    %881 = vdwg.mxu0
    %v882 = vpack.c.bf16 %v879, %v879
    %v883 = vld [vmem:[#allocation14] sm:$0xf]
    %v884 = vld [vmem:[#allocation14 + $0x4] sm:$0xf]
    %v885 = vld [vmem:[#allocation14 + $0x8] sm:$0xf]
    %v886 = vld [vmem:[#allocation14 + $0xc] sm:$0xf]
    %v887 = vld [vmem:[#allocation14 + $0x10] sm:$0xf]
    %v888 = vld [vmem:[#allocation14 + $0x14] sm:$0xf]
    %v889 = vld [vmem:[#allocation14 + $0x18] sm:$0xf]
    %v890 = vld [vmem:[#allocation14 + $0x1c] sm:$0xf]
    %v891 = vld [vmem:[#allocation14 + $0x20] sm:$0xf]
    %v892 = vld [vmem:[#allocation14 + $0x24] sm:$0xf]
    %v893 = vld [vmem:[#allocation14 + $0x28] sm:$0xf]
    %v894 = vld [vmem:[#allocation14 + $0x2c] sm:$0xf]
    %v895 = vld [vmem:[#allocation14 + $0x30] sm:$0xf]
    %v896 = vld [vmem:[#allocation14 + $0x34] sm:$0xf]
    %v897 = vld [vmem:[#allocation14 + $0x38] sm:$0xf]
    %v898 = vld [vmem:[#allocation14 + $0x3c] sm:$0xf]
    %v899 = vld [vmem:[#allocation19 + $0x13] ss:$0 sm:$0xff]
    %v916 = vunpack.c.l.b16 %v883
    %v917 = vunpack.c.l.b16 %v884
    %v918 = vunpack.c.l.b16 %v885
    %v919 = vunpack.c.l.b16 %v886
    %v920 = vunpack.c.l.b16 %v887
    %v921 = vunpack.c.l.b16 %v888
    %v922 = vunpack.c.l.b16 %v889
    %v923 = vunpack.c.l.b16 %v890
    %v924 = vunpack.c.l.b16 %v891
    %v925 = vunpack.c.l.b16 %v892
    %v926 = vunpack.c.l.b16 %v893
    %v927 = vunpack.c.l.b16 %v894
    %v928 = vunpack.c.l.b16 %v895
    %v929 = vunpack.c.l.b16 %v896
    %v930 = vunpack.c.l.b16 %v897
    %v931 = vunpack.c.l.b16 %v898
    %v932 = vpack.c.b16 %v917, %v916
    %v933 = vpack.c.b16 %v919, %v918
    %v934 = vpack.c.b16 %v921, %v920
    %v935 = vpack.c.b16 %v923, %v922
    %v936 = vpack.c.b16 %v925, %v924
    %v937 = vpack.c.b16 %v927, %v926
    %v938 = vpack.c.b16 %v929, %v928
    %v939 = vpack.c.b16 %v931, %v930
    %948 = vmatpush.bf16.msra.mxu0 %v939
    %949 = vmatpush.bf16.msra.mxu0 %v938
    %950 = vmatpush.bf16.msra.mxu0 %v937
    %951 = vmatpush.bf16.msra.mxu0 %v936
    %952 = vmatpush.bf16.msra.mxu0 %v935
    %953 = vmatpush.bf16.msra.mxu0 %v934
    %954 = vmatpush.bf16.msra.mxu0 %v933
    %955 = vmatpush.bf16.msra.mxu0 %v932
    %956 = vmatmul.bf16.gmra.mxu0 %v882
    %v957 = vpop.f32.mrf.mxu0
    %v958 = vadd.f32 %v899, %v957
    %v959 = vpop.f32.mrf.mxu0
    %960 = vdwg.mxu0
    %v961 = vrot.slane %v958, 4
    %v962 = vadd.f32 %v958, %v961
    %v963 = vrot.slane %v962, 2
    %v964 = vadd.f32 %v962, %v963
    %v965 = vrot.slane %v964, 1
    %v966 = vadd.f32 %v964, %v965
    %v967 = vmul.f32 %v966, %v291
    %v968 = vsub.f32 %v958, %v967
    %v969 = vmul.f32 %v968, %v968
    %v970 = vrot.slane %v969, 4
    %v971 = vadd.f32 %v969, %v970
    %v972 = vrot.slane %v971, 2
    %v973 = vadd.f32 %v971, %v972
    %v974 = vrot.slane %v973, 1
    %v975 = vadd.f32 %v973, %v974
    %v976 = vmul.f32 %v975, %v291
    %v977 = vld [vmem:[#allocation19 + $0x14] ss:$0 sm:$0xff]
    %v978 = vadd.f32 %v976, 1e-05
    %v979 = vrsqrt.pop %v978
    %v980 = vmul.f32 %v979, %v978
    %v981 = vmul.f32 %v980, %v979
    %v982 = vmul.f32 0.5, %v981
    %v983 = vsub.f32 1.5, %v982
    %v984 = vmul.f32 %v979, %v983
    %vm985 = vweird.f32 %v978
    %vm986 = vweird.f32 %v979
    %vm987 = vmor %vm985, %vm986
    %v988 = vsel %vm987, %v979, %v984
    %v989 = vmul.f32 %v977, %v988
    %v990 = vmul.f32 %v968, %v989
    %v991 = vld [vmem:[#allocation19 + $0x15] ss:$0 sm:$0xff]
    %v992 = vadd.f32 %v990, %v991
    %v993 = vmul.f32 %v992, 0.01
    %v994 = vmax.f32 %v992, %v993
    %v995 = vpack.c.bf16 %v994, %v994
    %v996 = vld [vmem:[#allocation16] sm:$0xff]
    %v997 = vld [vmem:[#allocation16 + $0x8] sm:$0xff]
    %v998 = vld [vmem:[#allocation16 + $0x10] sm:$0xff]
    %v999 = vld [vmem:[#allocation16 + $0x18] sm:$0xff]
    %v1000 = vld [vmem:[#allocation16 + $0x20] sm:$0xff]
    %v1001 = vld [vmem:[#allocation16 + $0x28] sm:$0xff]
    %v1002 = vld [vmem:[#allocation16 + $0x30] sm:$0xff]
    %v1003 = vld [vmem:[#allocation16 + $0x38] sm:$0xff]
    %v1004 = vld [vmem:[#allocation16 + $0x40] sm:$0xff]
    %v1005 = vld [vmem:[#allocation16 + $0x48] sm:$0xff]
    %v1006 = vld [vmem:[#allocation16 + $0x50] sm:$0xff]
    %v1007 = vld [vmem:[#allocation16 + $0x58] sm:$0xff]
    %v1008 = vld [vmem:[#allocation16 + $0x60] sm:$0xff]
    %v1009 = vld [vmem:[#allocation16 + $0x68] sm:$0xff]
    %v1010 = vld [vmem:[#allocation16 + $0x70] sm:$0xff]
    %v1011 = vld [vmem:[#allocation16 + $0x78] sm:$0xff]
    %s1012 = scalar_lea.vmem [#allocation19], 22
    %v1013 = vld [vmem:[%s1012] ss:$8 sm:$0x3]
    %v1015 = vperm.slane %v1013, 0
    %v1016 = vperm.slane %v1013, 1
    %v1035 = vunpack.c.l.b16 %v996
    %v1036 = vunpack.c.h.b16 %v996
    %v1037 = vunpack.c.l.b16 %v997
    %v1038 = vunpack.c.h.b16 %v997
    %v1039 = vunpack.c.l.b16 %v998
    %v1040 = vunpack.c.h.b16 %v998
    %v1041 = vunpack.c.l.b16 %v999
    %v1042 = vunpack.c.h.b16 %v999
    %v1043 = vunpack.c.l.b16 %v1000
    %v1044 = vunpack.c.h.b16 %v1000
    %v1045 = vunpack.c.l.b16 %v1001
    %v1046 = vunpack.c.h.b16 %v1001
    %v1047 = vunpack.c.l.b16 %v1002
    %v1048 = vunpack.c.h.b16 %v1002
    %v1049 = vunpack.c.l.b16 %v1003
    %v1050 = vunpack.c.h.b16 %v1003
    %v1051 = vunpack.c.l.b16 %v1004
    %v1052 = vunpack.c.h.b16 %v1004
    %v1053 = vunpack.c.l.b16 %v1005
    %v1054 = vunpack.c.h.b16 %v1005
    %v1055 = vunpack.c.l.b16 %v1006
    %v1056 = vunpack.c.h.b16 %v1006
    %v1057 = vunpack.c.l.b16 %v1007
    %v1058 = vunpack.c.h.b16 %v1007
    %v1059 = vunpack.c.l.b16 %v1008
    %v1060 = vunpack.c.h.b16 %v1008
    %v1061 = vunpack.c.l.b16 %v1009
    %v1062 = vunpack.c.h.b16 %v1009
    %v1063 = vunpack.c.l.b16 %v1010
    %v1064 = vunpack.c.h.b16 %v1010
    %v1065 = vunpack.c.l.b16 %v1011
    %v1066 = vunpack.c.h.b16 %v1011
    %v1067 = vpack.c.b16 %v1037, %v1035
    %v1068 = vpack.c.b16 %v1038, %v1036
    %v1069 = vpack.c.b16 %v1041, %v1039
    %v1070 = vpack.c.b16 %v1042, %v1040
    %v1071 = vpack.c.b16 %v1045, %v1043
    %v1072 = vpack.c.b16 %v1046, %v1044
    %v1073 = vpack.c.b16 %v1049, %v1047
    %v1074 = vpack.c.b16 %v1050, %v1048
    %v1075 = vpack.c.b16 %v1053, %v1051
    %v1076 = vpack.c.b16 %v1054, %v1052
    %v1077 = vpack.c.b16 %v1057, %v1055
    %v1078 = vpack.c.b16 %v1058, %v1056
    %v1079 = vpack.c.b16 %v1061, %v1059
    %v1080 = vpack.c.b16 %v1062, %v1060
    %v1081 = vpack.c.b16 %v1065, %v1063
    %v1082 = vpack.c.b16 %v1066, %v1064
    %1099 = vmatpush.bf16.msra.mxu0 %v1081
    %1100 = vmatpush.bf16.msra.mxu0 %v1079
    %1101 = vmatpush.bf16.msra.mxu0 %v1077
    %1102 = vmatpush.bf16.msra.mxu0 %v1075
    %1103 = vmatpush.bf16.msra.mxu0 %v1073
    %1104 = vmatpush.bf16.msra.mxu0 %v1071
    %1105 = vmatpush.bf16.msra.mxu0 %v1069
    %1106 = vmatpush.bf16.msra.mxu0 %v1067
    %1107 = vmatmul.bf16.gmra.mxu0 %v995
    %v1108 = vpop.f32.mrf.mxu0
    %v1109 = vadd.f32 %v1015, %v1108
    %v1110 = vpop.f32.mrf.mxu0
    %1111 = vdwg.mxu0
    %1112 = vmatpush.bf16.msra.mxu0 %v1082
    %1113 = vmatpush.bf16.msra.mxu0 %v1080
    %1114 = vmatpush.bf16.msra.mxu0 %v1078
    %1115 = vmatpush.bf16.msra.mxu0 %v1076
    %1116 = vmatpush.bf16.msra.mxu0 %v1074
    %1117 = vmatpush.bf16.msra.mxu0 %v1072
    %1118 = vmatpush.bf16.msra.mxu0 %v1070
    %1119 = vmatpush.bf16.msra.mxu0 %v1068
    %1120 = vmatmul.bf16.gmra.mxu0 %v995
    %v1121 = vpop.f32.mrf.mxu0
    %v1122 = vadd.f32 %v1016, %v1121
    %v1123 = vpop.f32.mrf.mxu0
    %1124 = vdwg.mxu0
    %v1125 = vrot.slane %v1109, 4
    %v1126 = vadd.f32 %v1109, %v1125
    %v1127 = vrot.slane %v1126, 2
    %v1128 = vadd.f32 %v1126, %v1127
    %v1129 = vrot.slane %v1128, 1
    %v1130 = vadd.f32 %v1128, %v1129
    %v1131 = vrot.slane %v1122, 4
    %v1132 = vadd.f32 %v1122, %v1131
    %v1133 = vrot.slane %v1132, 2
    %v1134 = vadd.f32 %v1132, %v1133
    %v1135 = vrot.slane %v1134, 1
    %v1136 = vadd.f32 %v1134, %v1135
    %v1137 = vmul.f32 %v1130, %v291
    %v1138 = vmul.f32 %v1136, %v291
    %v1139 = vsub.f32 %v1109, %v1137
    %v1140 = vsub.f32 %v1122, %v1138
    %v1141 = vmul.f32 %v1139, %v1139
    %v1142 = vmul.f32 %v1140, %v1140
    %v1143 = vrot.slane %v1141, 4
    %v1144 = vadd.f32 %v1141, %v1143
    %v1145 = vrot.slane %v1144, 2
    %v1146 = vadd.f32 %v1144, %v1145
    %v1147 = vrot.slane %v1146, 1
    %v1148 = vadd.f32 %v1146, %v1147
    %v1149 = vrot.slane %v1142, 4
    %v1150 = vadd.f32 %v1142, %v1149
    %v1151 = vrot.slane %v1150, 2
    %v1152 = vadd.f32 %v1150, %v1151
    %v1153 = vrot.slane %v1152, 1
    %v1154 = vadd.f32 %v1152, %v1153
    %v1155 = vmul.f32 %v1148, %v291
    %v1156 = vmul.f32 %v1154, %v291
    %s1157 = scalar_lea.vmem [#allocation19], 23
    %v1158 = vld [vmem:[%s1157] ss:$8 sm:$0x3]
    %v1159 = vadd.f32 %v1155, 1e-05
    %v1160 = vadd.f32 %v1156, 1e-05
    %v1161 = vrsqrt.pop %v1159
    %v1162 = vmul.f32 %v1161, %v1159
    %v1163 = vmul.f32 %v1162, %v1161
    %v1164 = vmul.f32 0.5, %v1163
    %v1165 = vsub.f32 1.5, %v1164
    %v1166 = vmul.f32 %v1161, %v1165
    %vm1167 = vweird.f32 %v1159
    %vm1168 = vweird.f32 %v1161
    %vm1169 = vmor %vm1167, %vm1168
    %v1170 = vsel %vm1169, %v1161, %v1166
    %v1171 = vrsqrt.pop %v1160
    %v1172 = vmul.f32 %v1171, %v1160
    %v1173 = vmul.f32 %v1172, %v1171
    %v1174 = vmul.f32 0.5, %v1173
    %v1175 = vsub.f32 1.5, %v1174
    %v1176 = vmul.f32 %v1171, %v1175
    %vm1177 = vweird.f32 %v1160
    %vm1178 = vweird.f32 %v1171
    %vm1179 = vmor %vm1177, %vm1178
    %v1180 = vsel %vm1179, %v1171, %v1176
    %v1183 = vrot.slane %v1180, 7
    %v1184 = vsel %vm339, %v1170, %v1183
    %v1186 = vmul.f32 %v1158, %v1184
    %v1188 = vperm.slane %v1186, 0
    %v1189 = vperm.slane %v1186, 1
    %v1192 = vmul.f32 %v1139, %v1188
    %v1193 = vmul.f32 %v1140, %v1189
    %s1194 = scalar_lea.vmem [#allocation19], 32
    %v1195 = vld [vmem:[%s1194] ss:$8 sm:$0x3]
    %v1197 = vperm.slane %v1195, 0
    %v1198 = vperm.slane %v1195, 1
    %v1201 = vadd.f32 %v1192, %v1197
    %v1202 = vadd.f32 %v1193, %v1198
    %v1203 = vmul.f32 %v1201, 0.01
    %v1204 = vmul.f32 %v1202, 0.01
    %v1205 = vmax.f32 %v1201, %v1203
    %v1206 = vmax.f32 %v1202, %v1204
    %v1207 = vpack.c.bf16 %v1205, %v1205
    %v1208 = vpack.c.bf16 %v1206, %v1206
    %v1209 = vld [vmem:[#allocation17] sm:$0xf]
    %v1210 = vld [vmem:[#allocation17 + $0x4] sm:$0xf]
    %v1211 = vld [vmem:[#allocation17 + $0x8] sm:$0xf]
    %v1212 = vld [vmem:[#allocation17 + $0xc] sm:$0xf]
    %v1213 = vld [vmem:[#allocation17 + $0x10] sm:$0xf]
    %v1214 = vld [vmem:[#allocation17 + $0x14] sm:$0xf]
    %v1215 = vld [vmem:[#allocation17 + $0x18] sm:$0xf]
    %v1216 = vld [vmem:[#allocation17 + $0x1c] sm:$0xf]
    %v1217 = vld [vmem:[#allocation17 + $0x20] sm:$0xf]
    %v1218 = vld [vmem:[#allocation17 + $0x24] sm:$0xf]
    %v1219 = vld [vmem:[#allocation17 + $0x28] sm:$0xf]
    %v1220 = vld [vmem:[#allocation17 + $0x2c] sm:$0xf]
    %v1221 = vld [vmem:[#allocation17 + $0x30] sm:$0xf]
    %v1222 = vld [vmem:[#allocation17 + $0x34] sm:$0xf]
    %v1223 = vld [vmem:[#allocation17 + $0x38] sm:$0xf]
    %v1224 = vld [vmem:[#allocation17 + $0x3c] sm:$0xf]
    %v1225 = vld [vmem:[#allocation17 + $0x40] sm:$0xf]
    %v1226 = vld [vmem:[#allocation17 + $0x44] sm:$0xf]
    %v1227 = vld [vmem:[#allocation17 + $0x48] sm:$0xf]
    %v1228 = vld [vmem:[#allocation17 + $0x4c] sm:$0xf]
    %v1229 = vld [vmem:[#allocation17 + $0x50] sm:$0xf]
    %v1230 = vld [vmem:[#allocation17 + $0x54] sm:$0xf]
    %v1231 = vld [vmem:[#allocation17 + $0x58] sm:$0xf]
    %v1232 = vld [vmem:[#allocation17 + $0x5c] sm:$0xf]
    %v1233 = vld [vmem:[#allocation17 + $0x60] sm:$0xf]
    %v1234 = vld [vmem:[#allocation17 + $0x64] sm:$0xf]
    %v1235 = vld [vmem:[#allocation17 + $0x68] sm:$0xf]
    %v1236 = vld [vmem:[#allocation17 + $0x6c] sm:$0xf]
    %v1237 = vld [vmem:[#allocation17 + $0x70] sm:$0xf]
    %v1238 = vld [vmem:[#allocation17 + $0x74] sm:$0xf]
    %v1239 = vld [vmem:[#allocation17 + $0x78] sm:$0xf]
    %v1240 = vld [vmem:[#allocation17 + $0x7c] sm:$0xf]
    %v1241 = vld [vmem:[#allocation19 + $0x21] ss:$0 sm:$0xff]
    %v1274 = vunpack.c.l.b16 %v1209
    %v1275 = vunpack.c.l.b16 %v1210
    %v1276 = vunpack.c.l.b16 %v1211
    %v1277 = vunpack.c.l.b16 %v1212
    %v1278 = vunpack.c.l.b16 %v1213
    %v1279 = vunpack.c.l.b16 %v1214
    %v1280 = vunpack.c.l.b16 %v1215
    %v1281 = vunpack.c.l.b16 %v1216
    %v1282 = vunpack.c.l.b16 %v1217
    %v1283 = vunpack.c.l.b16 %v1218
    %v1284 = vunpack.c.l.b16 %v1219
    %v1285 = vunpack.c.l.b16 %v1220
    %v1286 = vunpack.c.l.b16 %v1221
    %v1287 = vunpack.c.l.b16 %v1222
    %v1288 = vunpack.c.l.b16 %v1223
    %v1289 = vunpack.c.l.b16 %v1224
    %v1290 = vunpack.c.l.b16 %v1225
    %v1291 = vunpack.c.l.b16 %v1226
    %v1292 = vunpack.c.l.b16 %v1227
    %v1293 = vunpack.c.l.b16 %v1228
    %v1294 = vunpack.c.l.b16 %v1229
    %v1295 = vunpack.c.l.b16 %v1230
    %v1296 = vunpack.c.l.b16 %v1231
    %v1297 = vunpack.c.l.b16 %v1232
    %v1298 = vunpack.c.l.b16 %v1233
    %v1299 = vunpack.c.l.b16 %v1234
    %v1300 = vunpack.c.l.b16 %v1235
    %v1301 = vunpack.c.l.b16 %v1236
    %v1302 = vunpack.c.l.b16 %v1237
    %v1303 = vunpack.c.l.b16 %v1238
    %v1304 = vunpack.c.l.b16 %v1239
    %v1305 = vunpack.c.l.b16 %v1240
    %v1306 = vpack.c.b16 %v1275, %v1274
    %v1307 = vpack.c.b16 %v1277, %v1276
    %v1308 = vpack.c.b16 %v1279, %v1278
    %v1309 = vpack.c.b16 %v1281, %v1280
    %v1310 = vpack.c.b16 %v1283, %v1282
    %v1311 = vpack.c.b16 %v1285, %v1284
    %v1312 = vpack.c.b16 %v1287, %v1286
    %v1313 = vpack.c.b16 %v1289, %v1288
    %v1314 = vpack.c.b16 %v1291, %v1290
    %v1315 = vpack.c.b16 %v1293, %v1292
    %v1316 = vpack.c.b16 %v1295, %v1294
    %v1317 = vpack.c.b16 %v1297, %v1296
    %v1318 = vpack.c.b16 %v1299, %v1298
    %v1319 = vpack.c.b16 %v1301, %v1300
    %v1320 = vpack.c.b16 %v1303, %v1302
    %v1321 = vpack.c.b16 %v1305, %v1304
    %1338 = vmatpush.bf16.msra.mxu0 %v1313
    %1339 = vmatpush.bf16.msra.mxu0 %v1312
    %1340 = vmatpush.bf16.msra.mxu0 %v1311
    %1341 = vmatpush.bf16.msra.mxu0 %v1310
    %1342 = vmatpush.bf16.msra.mxu0 %v1309
    %1343 = vmatpush.bf16.msra.mxu0 %v1308
    %1344 = vmatpush.bf16.msra.mxu0 %v1307
    %1345 = vmatpush.bf16.msra.mxu0 %v1306
    %1346 = vmatmul.bf16.gmra.mxu0 %v1207
    %v1347 = vpop.f32.mrf.mxu0
    %v1348 = vadd.f32 %v1241, %v1347
    %v1349 = vpop.f32.mrf.mxu0
    %1350 = vdwg.mxu0
    %1351 = vmatpush.bf16.msra.mxu0 %v1321
    %1352 = vmatpush.bf16.msra.mxu0 %v1320
    %1353 = vmatpush.bf16.msra.mxu0 %v1319
    %1354 = vmatpush.bf16.msra.mxu0 %v1318
    %1355 = vmatpush.bf16.msra.mxu0 %v1317
    %1356 = vmatpush.bf16.msra.mxu0 %v1316
    %1357 = vmatpush.bf16.msra.mxu0 %v1315
    %1358 = vmatpush.bf16.msra.mxu0 %v1314
    %1359 = vmatmul.bf16.gmra.mxu0 %v1208
    %v1360 = vpop.f32.mrf.mxu0
    %v1361 = vadd.f32 %v1348, %v1360
    %v1362 = vpop.f32.mrf.mxu0
    %1363 = vdwg.mxu0
    %1364 = vst [vmem:[#allocation20] sm:$0xff] %v1361
    %1365 = vst [vmem:[#allocation21] sm:$0xff] %v781
    %1366 = vst [vmem:[#allocation23] sm:$0xff] %v794
    // Predicated region
    $region90: #{tpu_custom_call.1} parent=1 // pred_check
      _
    $region91: #{tpu_custom_call.1} parent=1 // pred_check_branch
      %1368 = sbr.rel (0) target = $region93
    $region92: #{tpu_custom_call.1} parent=1 // pred_region
      %1370 = vsyncadd [#allocation4], 0
      %s1372 = sshll.u32 [#allocation20], 4
      %s1373 = int_to_ptr.vmem [resolvable:$true] %s1372
      %s1374 = sshll.u32 %s11, 4
      %s1375 = int_to_ptr.hbm [resolvable:$true] %s1374
      %1377 = dma.vmem_to_hbm [thread:$0]  %s1373, 128, %s1375, [#allocation4]
    $region93: #{tpu_custom_call.1} parent=1 // pred_fallthru
      _
    // Predicated region
    $region94: #{tpu_custom_call.1} parent=1 // pred_check
      _
    $region95: #{tpu_custom_call.1} parent=1 // pred_check_branch
      %1379 = sbr.rel (0) target = $region97
    $region96: #{tpu_custom_call.1} parent=1 // pred_region
      %1381 = vsyncadd [#allocation22], 0
      %s1383 = sshll.u32 [#allocation21], 4
      %s1384 = int_to_ptr.vmem [resolvable:$true] %s1383
      %s1385 = sshll.u32 %s12, 4
      %s1386 = int_to_ptr.hbm [resolvable:$true] %s1385
      %1388 = dma.vmem_to_hbm [thread:$0]  %s1384, 128, %s1386, [#allocation22]
    $region97: #{tpu_custom_call.1} parent=1 // pred_fallthru
      _
    // Predicated region
    $region98: #{tpu_custom_call.1} parent=1 // pred_check
      _
    $region99: #{tpu_custom_call.1} parent=1 // pred_check_branch
      %1390 = sbr.rel (0) target = $region101
    $region100: #{tpu_custom_call.1} parent=1 // pred_region
      %1392 = vsyncadd [#allocation22], 0
      %s1394 = sshll.u32 [#allocation23], 4
      %s1395 = int_to_ptr.vmem [resolvable:$true] %s1394
      %s1396 = sshll.u32 %s13, 4
      %s1397 = int_to_ptr.hbm [resolvable:$true] %s1396
      %1399 = dma.vmem_to_hbm [thread:$0]  %s1395, 128, %s1397, [#allocation22]
    $region101: #{tpu_custom_call.1} parent=1 // pred_fallthru
      _
    // Predicated region
    $region102: #{tpu_custom_call.1} parent=1 // pred_check
      _
    $region103: #{tpu_custom_call.1} parent=1 // pred_check_branch
      %1401 = sbr.rel (0) target = $region105
    $region104: #{tpu_custom_call.1} parent=1 // pred_region
      %1403 = dma.done [#allocation4], 128
    $region105: #{tpu_custom_call.1} parent=1 // pred_fallthru
      _
    // Predicated region
    $region106: #{tpu_custom_call.1} parent=1 // pred_check
      _
    $region107: #{tpu_custom_call.1} parent=1 // pred_check_branch
      %1405 = sbr.rel (0) target = $region109
    $region108: #{tpu_custom_call.1} parent=1 // pred_region
      %1407 = dma.done [#allocation22], 128
    $region109: #{tpu_custom_call.1} parent=1 // pred_fallthru
      _
    // Predicated region
    $region110: #{tpu_custom_call.1} parent=1 // pred_check
      _
    $region111: #{tpu_custom_call.1} parent=1 // pred_check_branch
      %1409 = sbr.rel (0) target = $region113
    $region112: #{tpu_custom_call.1} parent=1 // pred_region
      %1411 = dma.done [#allocation22], 128
    $region113: #{tpu_custom_call.1} parent=1 // pred_fallthru
      _
    %1412 = vsyncpa [#allocation3], 1
    %1413 = vsyncpa [#allocation6], 1
    %1414 = vsyncpa [#allocation9], 1
    %1415 = vsyncpa [#allocation12], 1
    %1416 = vsyncpa [#allocation15], 1
    %1417 = vsyncpa [#allocation18], 1
    %1418 = vsyncpa [#allocation4], 1
    %1419 = vsyncpa [#allocation22], 1

</llo_original>
